<compile_context>
chip_gen: v6e
topology: v6e:2x2x1
jax: 0.10.0
libtpu: 0.0.40
codegen_flags: <defaults>
</compile_context>

<pallas_src>
import jax
import jax.numpy as jnp
from jax.experimental import pallas as pl
from jax.experimental.pallas import tpu as pltpu

# Keep both the reference (XLA) and the in-kernel matmuls at full f32 so the
# correctness comparison is tight.
jax.config.update("jax_default_matmul_precision", "highest")

HIDDEN = 256

# Tile targets: 256 x 2048 f32 = 2 MiB per block; (in + out) double-buffered
# = 8 MiB + tiny gamma/beta blocks, safely under the scoped-VMEM limits on
# v5e/v6e and under v7x's 64 MiB physical VMEM.
_ROW_TILE_TARGET = 256
_HW_TILE_TARGET = 2048
_VMEM_LIMIT_BYTES = 48 * 1024 * 1024


def _mlp_kernel(y_ref,
                w1g_ref, b1g_ref, w2g_ref, b2g_ref,
                w1b_ref, b1b_ref, w2b_ref, b2b_ref,
                gamma_ref, beta_ref):
    """Batched gamma/beta MLP: one invocation for all B rows (no grid loop)."""
    y = y_ref[...]
    hg = jnp.maximum(
        jnp.dot(y, w1g_ref[...], preferred_element_type=jnp.float32) + b1g_ref[...],
        0.0)
    gamma_ref[...] = (
        jnp.dot(hg, w2g_ref[...], preferred_element_type=jnp.float32) + b2g_ref[...]
    ).astype(gamma_ref.dtype)

    hb = jnp.maximum(
        jnp.dot(y, w1b_ref[...], preferred_element_type=jnp.float32) + b1b_ref[...],
        0.0)
    beta_ref[...] = (
        jnp.dot(hb, w2b_ref[...], preferred_element_type=jnp.float32) + b2b_ref[...]
    ).astype(beta_ref.dtype)


def _fma_kernel(g_ref, b_ref, x_ref, o_ref):
    """Memory-bound broadcast FMA: out = gamma * x + beta (per row)."""
    o_ref[...] = (g_ref[...] * x_ref[...] + b_ref[...]).astype(o_ref.dtype)


def _pick_tile(extent, unit, target):
    """Largest legal tile <= target: either the full extent or a multiple of `unit`."""
    if extent <= target:
        return extent
    tile = (target // unit) * unit
    return tile if tile >= unit else extent


def affine_pallas(x, y, params):
    """x: (B, C, H, W) float32, y: (B, cond_dim) float32."""
    B, C, H, W = x.shape
    HW = H * W
    R = B * C
    (w1g, b1g, w2g, b2g, w1b, b1b, w2b, b2b) = params

    # ---- Stage 1: gamma/beta for the whole batch in one shot (MXU) --------
    gamma, beta = pl.pallas_call(
        _mlp_kernel,
        out_shape=(jax.ShapeDtypeStruct((B, C), jnp.float32),
                   jax.ShapeDtypeStruct((B, C), jnp.float32)),
    )(y, w1g, b1g, w2g, b2g, w1b, b1b, w2b, b2b)

    # ---- Stage 2: lane-dense broadcast FMA over (B*C, HW) ------------------
    x2 = x.reshape(R, HW)
    g2 = gamma.reshape(R, 1).astype(x.dtype)
    b2 = beta.reshape(R, 1).astype(x.dtype)

    tr = _pick_tile(R, 8, _ROW_TILE_TARGET)       # sublane-dense row tile
    thw = _pick_tile(HW, 128, _HW_TILE_TARGET)    # lane-dense spatial tile
    grid = (pl.cdiv(R, tr), pl.cdiv(HW, thw))

    out2 = pl.pallas_call(
        _fma_kernel,
        out_shape=jax.ShapeDtypeStruct((R, HW), x.dtype),
        grid=grid,
        in_specs=[
            pl.BlockSpec((tr, 1), lambda r, t: (r, 0)),    # gamma (per-row scalar)
            pl.BlockSpec((tr, 1), lambda r, t: (r, 0)),    # beta  (per-row scalar)
            pl.BlockSpec((tr, thw), lambda r, t: (r, t)),  # x tile
        ],
        out_specs=pl.BlockSpec((tr, thw), lambda r, t: (r, t)),
        compiler_params=pltpu.CompilerParams(
            dimension_semantics=("parallel", "parallel"),
            vmem_limit_bytes=_VMEM_LIMIT_BYTES,
        ),
    )(g2, b2, x2)

    return out2.reshape(B, C, H, W)


def init_params(key, num_features, cond_dim):
    """Mirrors affine.__init__ / _initialize(): linear1 layers get random
    weights; fc_gamma.linear2 is zeros-weight / ones-bias; fc_beta.linear2 is
    zeros-weight / zeros-bias."""
    k1, k2, k3, k4 = jax.random.split(key, 4)
    bound1 = 1.0 / jnp.sqrt(cond_dim)
    w1g = jax.random.uniform(k1, (cond_dim, HIDDEN), jnp.float32, -bound1, bound1)
    b1g = jax.random.uniform(k2, (1, HIDDEN), jnp.float32, -bound1, bound1)
    w1b = jax.random.uniform(k3, (cond_dim, HIDDEN), jnp.float32, -bound1, bound1)
    b1b = jax.random.uniform(k4, (1, HIDDEN), jnp.float32, -bound1, bound1)
    w2g = jnp.zeros((HIDDEN, num_features), jnp.float32)
    b2g = jnp.ones((1, num_features), jnp.float32)
    w2b = jnp.zeros((HIDDEN, num_features), jnp.float32)
    b2b = jnp.zeros((1, num_features), jnp.float32)
    return (w1g, b1g, w2g, b2g, w1b, b1b, w2b, b2b)


def rand_params(key, num_features, cond_dim):
    """Fully random params (exercises the whole MLP path, unlike _initialize)."""
    ks = jax.random.split(key, 8)
    shapes = [(cond_dim, HIDDEN), (1, HIDDEN), (HIDDEN, num_features), (1, num_features)] * 2
    return tuple(0.1 * jax.random.normal(k, s, jnp.float32) for k, s in zip(ks, shapes))


def affine_reference(x, y, params):
    (w1g, b1g, w2g, b2g, w1b, b1b, w2b, b2b) = params
    gamma = jnp.maximum(y @ w1g + b1g, 0.0) @ w2g + b2g   # (B, C)
    beta = jnp.maximum(y @ w1b + b1b, 0.0) @ w2b + b2b    # (B, C)
    return gamma[:, :, None, None] * x + beta[:, :, None, None]


if __name__ == "__main__":
    B, C, H, W = 2, 4, 16, 16
    cond_dim = 32

    key = jax.random.PRNGKey(0)
    kx, ky, kp, kq = jax.random.split(key, 4)
    x = jax.random.normal(kx, (B, C, H, W), jnp.float32)
    y = jax.random.normal(ky, (B, cond_dim), jnp.float32)

    # Test 1: params matching the PyTorch _initialize() (gamma=1, beta=0).
    params = init_params(kp, C, cond_dim)
    out = jax.block_until_ready(affine_pallas(x, y, params))
    ref = affine_reference(x, y, params)
    assert out.shape == (B, C, H, W)
    assert jnp.allclose(out, ref, atol=1e-4, rtol=1e-4), "mismatch vs reference (init params)"

    # Test 2: fully random params (exercises the real MLP math).
    params_r = rand_params(kq, C, cond_dim)
    out_r = jax.block_until_ready(affine_pallas(x, y, params_r))
    ref_r = affine_reference(x, y, params_r)
    assert jnp.allclose(out_r, ref_r, atol=1e-4, rtol=1e-4), "mismatch vs reference (rand params)"

    print("KERNEL_OK")
</pallas_src>

<mosaic_0001>
module attributes {stable_mosaic.version = 11 : i64} {
  func.func @_mlp_kernel(%arg0: memref<2x32xf32, #tpu.memory_space<vmem>>, %arg1: memref<32x256xf32, #tpu.memory_space<vmem>>, %arg2: memref<1x256xf32, #tpu.memory_space<vmem>>, %arg3: memref<256x4xf32, #tpu.memory_space<vmem>>, %arg4: memref<1x4xf32, #tpu.memory_space<vmem>>, %arg5: memref<32x256xf32, #tpu.memory_space<vmem>>, %arg6: memref<1x256xf32, #tpu.memory_space<vmem>>, %arg7: memref<256x4xf32, #tpu.memory_space<vmem>>, %arg8: memref<1x4xf32, #tpu.memory_space<vmem>>, %arg9: memref<2x4xf32, #tpu.memory_space<vmem>>, %arg10: memref<2x4xf32, #tpu.memory_space<vmem>>) attributes {dimension_semantics = [], scalar_prefetch = 0 : i64, scratch_operands = 0 : i64, tpu.core_type = #tpu.core_type<tc>} {
    %c0 = arith.constant 0 : index
    %c0_0 = arith.constant 0 : index
    %0 = vector.load %arg0[%c0, %c0_0] : memref<2x32xf32, #tpu.memory_space<vmem>>, vector<2x32xf32>
    %c0_1 = arith.constant 0 : index
    %c0_2 = arith.constant 0 : index
    %1 = vector.load %arg1[%c0_1, %c0_2] : memref<32x256xf32, #tpu.memory_space<vmem>>, vector<32x256xf32>
    %cst = arith.constant dense<0.000000e+00> : vector<2x256xf32>
    %2 = tpu.matmul %0, %1, %cst {dimension_numbers = #tpu.dot_dimension_numbers<[1], [0], [0], [1], [0, 0, 1, 1], [], []>, precision = #tpu.contract_precision<fp32>} : vector<2x32xf32>, vector<32x256xf32>, vector<2x256xf32> -> vector<2x256xf32>
    %c0_3 = arith.constant 0 : index
    %c0_4 = arith.constant 0 : index
    %3 = vector.load %arg2[%c0_3, %c0_4] : memref<1x256xf32, #tpu.memory_space<vmem>>, vector<1x256xf32>
    %4 = vector.broadcast %3 : vector<1x256xf32> to vector<2x256xf32>
    %5 = arith.addf %2, %4 : vector<2x256xf32>
    %cst_5 = arith.constant 0.000000e+00 : f32
    %6 = vector.broadcast %cst_5 : f32 to vector<2x256xf32>
    %7 = arith.maximumf %5, %6 : vector<2x256xf32>
    %c0_6 = arith.constant 0 : index
    %c0_7 = arith.constant 0 : index
    %8 = vector.load %arg3[%c0_6, %c0_7] : memref<256x4xf32, #tpu.memory_space<vmem>>, vector<256x4xf32>
    %cst_8 = arith.constant dense<0.000000e+00> : vector<2x4xf32>
    %9 = tpu.matmul %7, %8, %cst_8 {dimension_numbers = #tpu.dot_dimension_numbers<[1], [0], [0], [1], [0, 0, 1, 1], [], []>, precision = #tpu.contract_precision<fp32>} : vector<2x256xf32>, vector<256x4xf32>, vector<2x4xf32> -> vector<2x4xf32>
    %c0_9 = arith.constant 0 : index
    %c0_10 = arith.constant 0 : index
    %10 = vector.load %arg4[%c0_9, %c0_10] : memref<1x4xf32, #tpu.memory_space<vmem>>, vector<1x4xf32>
    %11 = vector.broadcast %10 : vector<1x4xf32> to vector<2x4xf32>
    %12 = arith.addf %9, %11 : vector<2x4xf32>
    %c0_11 = arith.constant 0 : index
    %c0_12 = arith.constant 0 : index
    %13 = vector.load %arg9[%c0_11, %c0_12] : memref<2x4xf32, #tpu.memory_space<vmem>>, vector<2x4xf32>
    tpu.vector_store %arg9[%c0_11, %c0_12], %12 {strides = array<i32>} : memref<2x4xf32, #tpu.memory_space<vmem>>, vector<2x4xf32>,
    %c0_13 = arith.constant 0 : index
    %c0_14 = arith.constant 0 : index
    %14 = vector.load %arg5[%c0_13, %c0_14] : memref<32x256xf32, #tpu.memory_space<vmem>>, vector<32x256xf32>
    %cst_15 = arith.constant dense<0.000000e+00> : vector<2x256xf32>
    %15 = tpu.matmul %0, %14, %cst_15 {dimension_numbers = #tpu.dot_dimension_numbers<[1], [0], [0], [1], [0, 0, 1, 1], [], []>, precision = #tpu.contract_precision<fp32>} : vector<2x32xf32>, vector<32x256xf32>, vector<2x256xf32> -> vector<2x256xf32>
    %c0_16 = arith.constant 0 : index
    %c0_17 = arith.constant 0 : index
    %16 = vector.load %arg6[%c0_16, %c0_17] : memref<1x256xf32, #tpu.memory_space<vmem>>, vector<1x256xf32>
    %17 = vector.broadcast %16 : vector<1x256xf32> to vector<2x256xf32>
    %18 = arith.addf %15, %17 : vector<2x256xf32>
    %cst_18 = arith.constant 0.000000e+00 : f32
    %19 = vector.broadcast %cst_18 : f32 to vector<2x256xf32>
    %20 = arith.maximumf %18, %19 : vector<2x256xf32>
    %c0_19 = arith.constant 0 : index
    %c0_20 = arith.constant 0 : index
    %21 = vector.load %arg7[%c0_19, %c0_20] : memref<256x4xf32, #tpu.memory_space<vmem>>, vector<256x4xf32>
    %cst_21 = arith.constant dense<0.000000e+00> : vector<2x4xf32>
    %22 = tpu.matmul %20, %21, %cst_21 {dimension_numbers = #tpu.dot_dimension_numbers<[1], [0], [0], [1], [0, 0, 1, 1], [], []>, precision = #tpu.contract_precision<fp32>} : vector<2x256xf32>, vector<256x4xf32>, vector<2x4xf32> -> vector<2x4xf32>
    %c0_22 = arith.constant 0 : index
    %c0_23 = arith.constant 0 : index
    %23 = vector.load %arg8[%c0_22, %c0_23] : memref<1x4xf32, #tpu.memory_space<vmem>>, vector<1x4xf32>
    %24 = vector.broadcast %23 : vector<1x4xf32> to vector<2x4xf32>
    %25 = arith.addf %22, %24 : vector<2x4xf32>
    %c0_24 = arith.constant 0 : index
    %c0_25 = arith.constant 0 : index
    %26 = vector.load %arg10[%c0_24, %c0_25] : memref<2x4xf32, #tpu.memory_space<vmem>>, vector<2x4xf32>
    tpu.vector_store %arg10[%c0_24, %c0_25], %25 {strides = array<i32>} : memref<2x4xf32, #tpu.memory_space<vmem>>, vector<2x4xf32>,
    return
  }
}

</mosaic_0001>

<llo_original>
// kernel: tpu_custom_call.1
$region0: #{tpu_custom_call.1}
  #allocation0 [shape = 'u32[]', space=smem, size = 0x4, offset = 0x4, fixed_abs, tag = 'smem constant byte address 0x4 - core index']
  #allocation1 [shape = 'u32[144,128]{1,0:T(1,128)}', space=vmem, size = 0x12000, scoped, tag = 'internal scratch']
  %s0 = inlined_call_operand.vmem [shape: f32[2,32], index: 0, kind: input, shape index: {}]
  %s1 = inlined_call_operand.vmem [shape: f32[32,256], index: 1, kind: input, shape index: {}]
  %s2 = inlined_call_operand.vmem [shape: f32[1,256], index: 2, kind: input, shape index: {}]
  %s3 = inlined_call_operand.vmem [shape: f32[256,4], index: 3, kind: input, shape index: {}]
  %s4 = inlined_call_operand.vmem [shape: f32[1,4], index: 4, kind: input, shape index: {}]
  %s5 = inlined_call_operand.vmem [shape: f32[32,256], index: 5, kind: input, shape index: {}]
  %s6 = inlined_call_operand.vmem [shape: f32[1,256], index: 6, kind: input, shape index: {}]
  %s7 = inlined_call_operand.vmem [shape: f32[256,4], index: 7, kind: input, shape index: {}]
  %s8 = inlined_call_operand.vmem [shape: f32[1,4], index: 8, kind: input, shape index: {}]
  %s9 = inlined_call_operand.hbm [shape: f32[2,4], index: 9, kind: output, shape index: {0}]
  %s10 = inlined_call_operand.hbm [shape: f32[2,4], index: 10, kind: output, shape index: {1}]
  %11 = xla_tuple %s9, %s10
  %s12 = sld [smem:[#allocation0]]
  $region54: #{tpu_custom_call.1} parent=0
    _
  %s14 = ssub.s32 1, %s12
  %s15 = scalar_select 0, %s14, %s12
  $region1: #{tpu_custom_call.1} parent=0
    #allocation2 [shape = 'u8[1024]{0}', space=vmem, size = 0x400, scoped, tag = 'output window, operand 0, single buffered']
    #allocation3 [shape = 's32[1]{0}', space=sflag, size = 0x4, scoped, tag = 'scoped memory for tpu_custom_call.1']
    #allocation4 [shape = 'u8[1024]{0}', space=vmem, size = 0x400, scoped, tag = 'output window, operand 1, single buffered']
    #allocation5 [shape = 's32[1]{0}', space=sflag, size = 0x4, scoped, tag = 'scoped memory for tpu_custom_call.1']
    %16 = vsyncpa [#allocation3], 0
    %17 = vsyncpa [#allocation5], 0
    // Predicated region
    $region2: #{tpu_custom_call.1} parent=1 // pred_check
      _
    $region3: #{tpu_custom_call.1} parent=1 // pred_check_branch
      %19 = sbr.rel (0) target = $region5
    $region4: #{tpu_custom_call.1} parent=1 // pred_region
      _
    $region5: #{tpu_custom_call.1} parent=1 // pred_fallthru
      _
    // Predicated region
    $region6: #{tpu_custom_call.1} parent=1 // pred_check
      _
    $region7: #{tpu_custom_call.1} parent=1 // pred_check_branch
      %21 = sbr.rel (0) target = $region9
    $region8: #{tpu_custom_call.1} parent=1 // pred_region
      _
    $region9: #{tpu_custom_call.1} parent=1 // pred_fallthru
      _
    // Predicated region
    $region10: #{tpu_custom_call.1} parent=1 // pred_check
      _
    $region11: #{tpu_custom_call.1} parent=1 // pred_check_branch
      %23 = sbr.rel (0) target = $region13
    $region12: #{tpu_custom_call.1} parent=1 // pred_region
      _
    $region13: #{tpu_custom_call.1} parent=1 // pred_fallthru
      _
    // Predicated region
    $region14: #{tpu_custom_call.1} parent=1 // pred_check
      _
    $region15: #{tpu_custom_call.1} parent=1 // pred_check_branch
      %25 = sbr.rel (0) target = $region17
    $region16: #{tpu_custom_call.1} parent=1 // pred_region
      _
    $region17: #{tpu_custom_call.1} parent=1 // pred_fallthru
      _
    // Predicated region
    $region18: #{tpu_custom_call.1} parent=1 // pred_check
      _
    $region19: #{tpu_custom_call.1} parent=1 // pred_check_branch
      %27 = sbr.rel (0) target = $region21
    $region20: #{tpu_custom_call.1} parent=1 // pred_region
      _
    $region21: #{tpu_custom_call.1} parent=1 // pred_fallthru
      _
    // Predicated region
    $region22: #{tpu_custom_call.1} parent=1 // pred_check
      _
    $region23: #{tpu_custom_call.1} parent=1 // pred_check_branch
      %29 = sbr.rel (0) target = $region25
    $region24: #{tpu_custom_call.1} parent=1 // pred_region
      _
    $region25: #{tpu_custom_call.1} parent=1 // pred_fallthru
      _
    // Predicated region
    $region26: #{tpu_custom_call.1} parent=1 // pred_check
      _
    $region27: #{tpu_custom_call.1} parent=1 // pred_check_branch
      %31 = sbr.rel (0) target = $region29
    $region28: #{tpu_custom_call.1} parent=1 // pred_region
      _
    $region29: #{tpu_custom_call.1} parent=1 // pred_fallthru
      _
    // Predicated region
    $region30: #{tpu_custom_call.1} parent=1 // pred_check
      _
    $region31: #{tpu_custom_call.1} parent=1 // pred_check_branch
      %33 = sbr.rel (0) target = $region33
    $region32: #{tpu_custom_call.1} parent=1 // pred_region
      _
    $region33: #{tpu_custom_call.1} parent=1 // pred_fallthru
      _
    // Predicated region
    $region34: #{tpu_custom_call.1} parent=1 // pred_check
      _
    $region35: #{tpu_custom_call.1} parent=1 // pred_check_branch
      %35 = sbr.rel (0) target = $region37
    $region36: #{tpu_custom_call.1} parent=1 // pred_region
      _
    $region37: #{tpu_custom_call.1} parent=1 // pred_fallthru
      _
    %v36 = vld [vmem:[%s0] sm:$0x3]
    %v37 = vld [vmem:[%s1] sm:$0xff]
    %v38 = vld [vmem:[%s1 + $0x8] sm:$0xff]
    %v39 = vld [vmem:[%s1 + $0x10] sm:$0xff]
    %v40 = vld [vmem:[%s1 + $0x18] sm:$0xff]
    %v41 = vld [vmem:[%s1 + $0x20] sm:$0xff]
    %v42 = vld [vmem:[%s1 + $0x28] sm:$0xff]
    %v43 = vld [vmem:[%s1 + $0x30] sm:$0xff]
    %v44 = vld [vmem:[%s1 + $0x38] sm:$0xff]
    %v45 = vld [vmem:[%s2] sm:$0x3]
    %v47 = vlaneseq
    %v48 = vshrl.u32 %v47, 7
    %v49 = vsub.s32 0, %v48
    %v50 = vrot.slane %v45, %v49
    %v51 = vlaneseq
    %v52 = vshrl.u32 %v51, 7
    %v53 = vsub.s32 1, %v52
    %v54 = vrot.slane %v45, %v53
    %vm57 = vcmask 261120
    %v59 = vsel %vm57, %v36, 0
    %61 = vmatprep.subr.mxu0 0.0
    %62 = vmatpush1.msra.mxu0 0.0
    %63 = vmatprep.subr.mxu0 0.0
    %64 = vmatpush1.msra.mxu0 0.0
    %65 = vmatprep.subr.mxu0 0.0
    %66 = vmatpush1.msra.mxu0 0.0
    %67 = vmatprep.subr.mxu0 0.0
    %68 = vmatpush1.msra.mxu0 0.0
    %69 = vmatprep.subr.mxu0 0.0
    %70 = vmatpush1.msra.mxu0 0.0
    %71 = vmatprep.subr.mxu0 0.0
    %72 = vmatpush1.msra.mxu0 0.0
    %73 = vmatprep.subr.mxu0 0.0
    %74 = vmatpush1.msra.mxu0 0.0
    %75 = vmatprep.subr.mxu0 0.0
    %76 = vmatpush1.msra.mxu0 0.0
    %77 = vmatprep.subr.mxu0 0.0
    %78 = vmatpush1.msra.mxu0 0.0
    %79 = vmatprep.subr.mxu0 0.0
    %80 = vmatpush1.msra.mxu0 0.0
    %81 = vmatprep.subr.mxu0 0.0
    %82 = vmatpush1.msra.mxu0 0.0
    %83 = vmatprep.subr.mxu0 0.0
    %84 = vmatpush1.msra.mxu0 0.0
    %v85 = vand.u32 %v44, 4294901760
    %86 = vmatprep.subr.mxu0 %v85
    %v87 = vand.u32 %v43, 4294901760
    %88 = vmatpush1.msra.mxu0 %v87
    %v89 = vand.u32 %v42, 4294901760
    %90 = vmatprep.subr.mxu0 %v89
    %v91 = vand.u32 %v41, 4294901760
    %92 = vmatpush1.msra.mxu0 %v91
    %v93 = vand.u32 %v40, 4294901760
    %94 = vmatprep.subr.mxu0 %v93
    %v95 = vand.u32 %v39, 4294901760
    %96 = vmatpush1.msra.mxu0 %v95
    %v97 = vand.u32 %v38, 4294901760
    %98 = vmatprep.subr.mxu0 %v97
    %v99 = vand.u32 %v37, 4294901760
    %100 = vmatpush1.msra.mxu0 %v99
    %101 = vmatprep.subr.mxu0 0.0
    %102 = vmatpush2.msra.mxu0 0.0
    %103 = vmatprep.subr.mxu0 0.0
    %104 = vmatpush2.msra.mxu0 0.0
    %105 = vmatprep.subr.mxu0 0.0
    %106 = vmatpush2.msra.mxu0 0.0
    %107 = vmatprep.subr.mxu0 0.0
    %108 = vmatpush2.msra.mxu0 0.0
    %109 = vmatprep.subr.mxu0 0.0
    %110 = vmatpush2.msra.mxu0 0.0
    %111 = vmatprep.subr.mxu0 0.0
    %112 = vmatpush2.msra.mxu0 0.0
    %113 = vmatprep.subr.mxu0 0.0
    %114 = vmatpush2.msra.mxu0 0.0
    %115 = vmatprep.subr.mxu0 0.0
    %116 = vmatpush2.msra.mxu0 0.0
    %117 = vmatprep.subr.mxu0 0.0
    %118 = vmatpush2.msra.mxu0 0.0
    %119 = vmatprep.subr.mxu0 0.0
    %120 = vmatpush2.msra.mxu0 0.0
    %121 = vmatprep.subr.mxu0 0.0
    %122 = vmatpush2.msra.mxu0 0.0
    %123 = vmatprep.subr.mxu0 0.0
    %124 = vmatpush2.msra.mxu0 0.0
    %125 = vmatprep.subr.mxu0 0.0
    %126 = vmatpush2.msra.mxu0 0.0
    %127 = vmatprep.subr.mxu0 0.0
    %128 = vmatpush2.msra.mxu0 0.0
    %129 = vmatprep.subr.mxu0 0.0
    %130 = vmatpush2.msra.mxu0 0.0
    %131 = vmatprep.subr.mxu0 0.0
    %132 = vmatpush2.msra.mxu0 0.0
    %133 = vmatprep.mubr.f32.mxu0 0.0
    %v134 = vand.u32 %v59, 4294901760
    %v135 = vsub.f32 %v59, %v134
    %v136 = vand.u32 %v135, 4294901760
    %v137 = vsub.f32 %v135, %v136
    %v138 = vand.u32 %v137, 4294901760
    %139 = vmatmul.mubr.f32.gmra.mxu0 %v138
    %v140 = vpop.f32.mrf.mxu0
    %v141 = vadd.f32 %v50, %v140
    %v142 = vpop.f32.mrf.mxu0
    %v143 = vadd.f32 %v54, %v142
    %144 = vdwg.mxu0
    %145 = vmatprep.subr.mxu0 0.0
    %146 = vmatpush1.msra.mxu0 0.0
    %147 = vmatprep.subr.mxu0 0.0
    %148 = vmatpush1.msra.mxu0 0.0
    %149 = vmatprep.subr.mxu0 0.0
    %150 = vmatpush1.msra.mxu0 0.0
    %151 = vmatprep.subr.mxu0 0.0
    %152 = vmatpush1.msra.mxu0 0.0
    %153 = vmatprep.subr.mxu0 0.0
    %154 = vmatpush1.msra.mxu0 0.0
    %155 = vmatprep.subr.mxu0 0.0
    %156 = vmatpush1.msra.mxu0 0.0
    %157 = vmatprep.subr.mxu0 0.0
    %158 = vmatpush1.msra.mxu0 0.0
    %159 = vmatprep.subr.mxu0 0.0
    %160 = vmatpush1.msra.mxu0 0.0
    %161 = vmatprep.subr.mxu0 0.0
    %162 = vmatpush1.msra.mxu0 0.0
    %163 = vmatprep.subr.mxu0 0.0
    %164 = vmatpush1.msra.mxu0 0.0
    %165 = vmatprep.subr.mxu0 0.0
    %166 = vmatpush1.msra.mxu0 0.0
    %167 = vmatprep.subr.mxu0 0.0
    %168 = vmatpush1.msra.mxu0 0.0
    %v169 = vand.u32 %v44, 4294901760
    %v170 = vsub.f32 %v44, %v169
    %v171 = vand.u32 %v170, 4294901760
    %v172 = vsub.f32 %v170, %v171
    %v173 = vand.u32 %v172, 4294901760
    %174 = vmatprep.subr.mxu0 %v173
    %v175 = vand.u32 %v43, 4294901760
    %v176 = vsub.f32 %v43, %v175
    %v177 = vand.u32 %v176, 4294901760
    %v178 = vsub.f32 %v176, %v177
    %v179 = vand.u32 %v178, 4294901760
    %180 = vmatpush1.msra.mxu0 %v179
    %v181 = vand.u32 %v42, 4294901760
    %v182 = vsub.f32 %v42, %v181
    %v183 = vand.u32 %v182, 4294901760
    %v184 = vsub.f32 %v182, %v183
    %v185 = vand.u32 %v184, 4294901760
    %186 = vmatprep.subr.mxu0 %v185
    %v187 = vand.u32 %v41, 4294901760
    %v188 = vsub.f32 %v41, %v187
    %v189 = vand.u32 %v188, 4294901760
    %v190 = vsub.f32 %v188, %v189
    %v191 = vand.u32 %v190, 4294901760
    %192 = vmatpush1.msra.mxu0 %v191
    %v193 = vand.u32 %v40, 4294901760
    %v194 = vsub.f32 %v40, %v193
    %v195 = vand.u32 %v194, 4294901760
    %v196 = vsub.f32 %v194, %v195
    %v197 = vand.u32 %v196, 4294901760
    %198 = vmatprep.subr.mxu0 %v197
    %v199 = vand.u32 %v39, 4294901760
    %v200 = vsub.f32 %v39, %v199
    %v201 = vand.u32 %v200, 4294901760
    %v202 = vsub.f32 %v200, %v201
    %v203 = vand.u32 %v202, 4294901760
    %204 = vmatpush1.msra.mxu0 %v203
    %v205 = vand.u32 %v38, 4294901760
    %v206 = vsub.f32 %v38, %v205
    %v207 = vand.u32 %v206, 4294901760
    %v208 = vsub.f32 %v206, %v207
    %v209 = vand.u32 %v208, 4294901760
    %210 = vmatprep.subr.mxu0 %v209
    %v211 = vand.u32 %v37, 4294901760
    %v212 = vsub.f32 %v37, %v211
    %v213 = vand.u32 %v212, 4294901760
    %v214 = vsub.f32 %v212, %v213
    %v215 = vand.u32 %v214, 4294901760
    %216 = vmatpush1.msra.mxu0 %v215
    %217 = vmatprep.subr.mxu0 0.0
    %218 = vmatpush2.msra.mxu0 0.0
    %219 = vmatprep.subr.mxu0 0.0
    %220 = vmatpush2.msra.mxu0 0.0
    %221 = vmatprep.subr.mxu0 0.0
    %222 = vmatpush2.msra.mxu0 0.0
    %223 = vmatprep.subr.mxu0 0.0
    %224 = vmatpush2.msra.mxu0 0.0
    %225 = vmatprep.subr.mxu0 0.0
    %226 = vmatpush2.msra.mxu0 0.0
    %227 = vmatprep.subr.mxu0 0.0
    %228 = vmatpush2.msra.mxu0 0.0
    %229 = vmatprep.subr.mxu0 0.0
    %230 = vmatpush2.msra.mxu0 0.0
    %231 = vmatprep.subr.mxu0 0.0
    %232 = vmatpush2.msra.mxu0 0.0
    %233 = vmatprep.subr.mxu0 0.0
    %234 = vmatpush2.msra.mxu0 0.0
    %235 = vmatprep.subr.mxu0 0.0
    %236 = vmatpush2.msra.mxu0 0.0
    %237 = vmatprep.subr.mxu0 0.0
    %238 = vmatpush2.msra.mxu0 0.0
    %239 = vmatprep.subr.mxu0 0.0
    %240 = vmatpush2.msra.mxu0 0.0
    %241 = vmatprep.subr.mxu0 0.0
    %242 = vmatpush2.msra.mxu0 0.0
    %243 = vmatprep.subr.mxu0 0.0
    %244 = vmatpush2.msra.mxu0 0.0
    %245 = vmatprep.subr.mxu0 0.0
    %246 = vmatpush2.msra.mxu0 0.0
    %247 = vmatprep.subr.mxu0 0.0
    %248 = vmatpush2.msra.mxu0 0.0
    %249 = vmatprep.mubr.f32.mxu0 0.0
    %v250 = vand.u32 %v59, 4294901760
    %251 = vmatmul.mubr.f32.gmra.mxu0 %v250
    %v252 = vpop.f32.mrf.mxu0
    %v253 = vadd.f32 %v141, %v252
    %v254 = vpop.f32.mrf.mxu0
    %v255 = vadd.f32 %v143, %v254
    %256 = vdwg.mxu0
    %257 = vmatprep.subr.mxu0 0.0
    %258 = vmatpush1.msra.mxu0 0.0
    %259 = vmatprep.subr.mxu0 0.0
    %260 = vmatpush1.msra.mxu0 0.0
    %261 = vmatprep.subr.mxu0 0.0
    %262 = vmatpush1.msra.mxu0 0.0
    %263 = vmatprep.subr.mxu0 0.0
    %264 = vmatpush1.msra.mxu0 0.0
    %265 = vmatprep.subr.mxu0 0.0
    %266 = vmatpush1.msra.mxu0 0.0
    %267 = vmatprep.subr.mxu0 0.0
    %268 = vmatpush1.msra.mxu0 0.0
    %269 = vmatprep.subr.mxu0 0.0
    %270 = vmatpush1.msra.mxu0 0.0
    %271 = vmatprep.subr.mxu0 0.0
    %272 = vmatpush1.msra.mxu0 0.0
    %273 = vmatprep.subr.mxu0 0.0
    %274 = vmatpush1.msra.mxu0 0.0
    %275 = vmatprep.subr.mxu0 0.0
    %276 = vmatpush1.msra.mxu0 0.0
    %277 = vmatprep.subr.mxu0 0.0
    %278 = vmatpush1.msra.mxu0 0.0
    %279 = vmatprep.subr.mxu0 0.0
    %280 = vmatpush1.msra.mxu0 0.0
    %v281 = vand.u32 %v44, 4294901760
    %v282 = vsub.f32 %v44, %v281
    %283 = vmatprep.subr.mxu0 %v282
    %v284 = vand.u32 %v43, 4294901760
    %v285 = vsub.f32 %v43, %v284
    %286 = vmatpush1.msra.mxu0 %v285
    %v287 = vand.u32 %v42, 4294901760
    %v288 = vsub.f32 %v42, %v287
    %289 = vmatprep.subr.mxu0 %v288
    %v290 = vand.u32 %v41, 4294901760
    %v291 = vsub.f32 %v41, %v290
    %292 = vmatpush1.msra.mxu0 %v291
    %v293 = vand.u32 %v40, 4294901760
    %v294 = vsub.f32 %v40, %v293
    %295 = vmatprep.subr.mxu0 %v294
    %v296 = vand.u32 %v39, 4294901760
    %v297 = vsub.f32 %v39, %v296
    %298 = vmatpush1.msra.mxu0 %v297
    %v299 = vand.u32 %v38, 4294901760
    %v300 = vsub.f32 %v38, %v299
    %301 = vmatprep.subr.mxu0 %v300
    %v302 = vand.u32 %v37, 4294901760
    %v303 = vsub.f32 %v37, %v302
    %304 = vmatpush1.msra.mxu0 %v303
    %305 = vmatprep.subr.mxu0 0.0
    %306 = vmatpush2.msra.mxu0 0.0
    %307 = vmatprep.subr.mxu0 0.0
    %308 = vmatpush2.msra.mxu0 0.0
    %309 = vmatprep.subr.mxu0 0.0
    %310 = vmatpush2.msra.mxu0 0.0
    %311 = vmatprep.subr.mxu0 0.0
    %312 = vmatpush2.msra.mxu0 0.0
    %313 = vmatprep.subr.mxu0 0.0
    %314 = vmatpush2.msra.mxu0 0.0
    %315 = vmatprep.subr.mxu0 0.0
    %316 = vmatpush2.msra.mxu0 0.0
    %317 = vmatprep.subr.mxu0 0.0
    %318 = vmatpush2.msra.mxu0 0.0
    %319 = vmatprep.subr.mxu0 0.0
    %320 = vmatpush2.msra.mxu0 0.0
    %321 = vmatprep.subr.mxu0 0.0
    %322 = vmatpush2.msra.mxu0 0.0
    %323 = vmatprep.subr.mxu0 0.0
    %324 = vmatpush2.msra.mxu0 0.0
    %325 = vmatprep.subr.mxu0 0.0
    %326 = vmatpush2.msra.mxu0 0.0
    %327 = vmatprep.subr.mxu0 0.0
    %328 = vmatpush2.msra.mxu0 0.0
    %329 = vmatprep.subr.mxu0 0.0
    %330 = vmatpush2.msra.mxu0 0.0
    %331 = vmatprep.subr.mxu0 0.0
    %332 = vmatpush2.msra.mxu0 0.0
    %333 = vmatprep.subr.mxu0 0.0
    %334 = vmatpush2.msra.mxu0 0.0
    %335 = vmatprep.subr.mxu0 0.0
    %336 = vmatpush2.msra.mxu0 0.0
    %337 = vmatprep.mubr.f32.mxu0 0.0
    %v338 = vand.u32 %v59, 4294901760
    %v339 = vsub.f32 %v59, %v338
    %340 = vmatmul.mubr.f32.gmra.mxu0 %v339
    %v341 = vpop.f32.mrf.mxu0
    %v342 = vadd.f32 %v253, %v341
    %v343 = vpop.f32.mrf.mxu0
    %v344 = vadd.f32 %v255, %v343
    %345 = vdwg.mxu0
    %346 = vmatprep.subr.mxu0 0.0
    %347 = vmatpush1.msra.mxu0 0.0
    %348 = vmatprep.subr.mxu0 0.0
    %349 = vmatpush1.msra.mxu0 0.0
    %350 = vmatprep.subr.mxu0 0.0
    %351 = vmatpush1.msra.mxu0 0.0
    %352 = vmatprep.subr.mxu0 0.0
    %353 = vmatpush1.msra.mxu0 0.0
    %354 = vmatprep.subr.mxu0 0.0
    %355 = vmatpush1.msra.mxu0 0.0
    %356 = vmatprep.subr.mxu0 0.0
    %357 = vmatpush1.msra.mxu0 0.0
    %358 = vmatprep.subr.mxu0 0.0
    %359 = vmatpush1.msra.mxu0 0.0
    %360 = vmatprep.subr.mxu0 0.0
    %361 = vmatpush1.msra.mxu0 0.0
    %362 = vmatprep.subr.mxu0 0.0
    %363 = vmatpush1.msra.mxu0 0.0
    %364 = vmatprep.subr.mxu0 0.0
    %365 = vmatpush1.msra.mxu0 0.0
    %366 = vmatprep.subr.mxu0 0.0
    %367 = vmatpush1.msra.mxu0 0.0
    %368 = vmatprep.subr.mxu0 0.0
    %369 = vmatpush1.msra.mxu0 0.0
    %v370 = vand.u32 %v44, 4294901760
    %371 = vmatprep.subr.mxu0 %v370
    %v372 = vand.u32 %v43, 4294901760
    %373 = vmatpush1.msra.mxu0 %v372
    %v374 = vand.u32 %v42, 4294901760
    %375 = vmatprep.subr.mxu0 %v374
    %v376 = vand.u32 %v41, 4294901760
    %377 = vmatpush1.msra.mxu0 %v376
    %v378 = vand.u32 %v40, 4294901760
    %379 = vmatprep.subr.mxu0 %v378
    %v380 = vand.u32 %v39, 4294901760
    %381 = vmatpush1.msra.mxu0 %v380
    %v382 = vand.u32 %v38, 4294901760
    %383 = vmatprep.subr.mxu0 %v382
    %v384 = vand.u32 %v37, 4294901760
    %385 = vmatpush1.msra.mxu0 %v384
    %386 = vmatprep.subr.mxu0 0.0
    %387 = vmatpush2.msra.mxu0 0.0
    %388 = vmatprep.subr.mxu0 0.0
    %389 = vmatpush2.msra.mxu0 0.0
    %390 = vmatprep.subr.mxu0 0.0
    %391 = vmatpush2.msra.mxu0 0.0
    %392 = vmatprep.subr.mxu0 0.0
    %393 = vmatpush2.msra.mxu0 0.0
    %394 = vmatprep.subr.mxu0 0.0
    %395 = vmatpush2.msra.mxu0 0.0
    %396 = vmatprep.subr.mxu0 0.0
    %397 = vmatpush2.msra.mxu0 0.0
    %398 = vmatprep.subr.mxu0 0.0
    %399 = vmatpush2.msra.mxu0 0.0
    %400 = vmatprep.subr.mxu0 0.0
    %401 = vmatpush2.msra.mxu0 0.0
    %402 = vmatprep.subr.mxu0 0.0
    %403 = vmatpush2.msra.mxu0 0.0
    %404 = vmatprep.subr.mxu0 0.0
    %405 = vmatpush2.msra.mxu0 0.0
    %406 = vmatprep.subr.mxu0 0.0
    %407 = vmatpush2.msra.mxu0 0.0
    %408 = vmatprep.subr.mxu0 0.0
    %409 = vmatpush2.msra.mxu0 0.0
    %410 = vmatprep.subr.mxu0 0.0
    %411 = vmatpush2.msra.mxu0 0.0
    %412 = vmatprep.subr.mxu0 0.0
    %413 = vmatpush2.msra.mxu0 0.0
    %414 = vmatprep.subr.mxu0 0.0
    %415 = vmatpush2.msra.mxu0 0.0
    %416 = vmatprep.subr.mxu0 0.0
    %417 = vmatpush2.msra.mxu0 0.0
    %418 = vmatprep.mubr.f32.mxu0 0.0
    %v419 = vand.u32 %v59, 4294901760
    %v420 = vsub.f32 %v59, %v419
    %v421 = vand.u32 %v420, 4294901760
    %422 = vmatmul.mubr.f32.gmra.mxu0 %v421
    %v423 = vpop.f32.mrf.mxu0
    %v424 = vadd.f32 %v342, %v423
    %v425 = vpop.f32.mrf.mxu0
    %v426 = vadd.f32 %v344, %v425
    %427 = vdwg.mxu0
    %428 = vmatprep.subr.mxu0 0.0
    %429 = vmatpush1.msra.mxu0 0.0
    %430 = vmatprep.subr.mxu0 0.0
    %431 = vmatpush1.msra.mxu0 0.0
    %432 = vmatprep.subr.mxu0 0.0
    %433 = vmatpush1.msra.mxu0 0.0
    %434 = vmatprep.subr.mxu0 0.0
    %435 = vmatpush1.msra.mxu0 0.0
    %436 = vmatprep.subr.mxu0 0.0
    %437 = vmatpush1.msra.mxu0 0.0
    %438 = vmatprep.subr.mxu0 0.0
    %439 = vmatpush1.msra.mxu0 0.0
    %440 = vmatprep.subr.mxu0 0.0
    %441 = vmatpush1.msra.mxu0 0.0
    %442 = vmatprep.subr.mxu0 0.0
    %443 = vmatpush1.msra.mxu0 0.0
    %444 = vmatprep.subr.mxu0 0.0
    %445 = vmatpush1.msra.mxu0 0.0
    %446 = vmatprep.subr.mxu0 0.0
    %447 = vmatpush1.msra.mxu0 0.0
    %448 = vmatprep.subr.mxu0 0.0
    %449 = vmatpush1.msra.mxu0 0.0
    %450 = vmatprep.subr.mxu0 0.0
    %451 = vmatpush1.msra.mxu0 0.0
    %v452 = vand.u32 %v44, 4294901760
    %v453 = vsub.f32 %v44, %v452
    %v454 = vand.u32 %v453, 4294901760
    %455 = vmatprep.subr.mxu0 %v454
    %v456 = vand.u32 %v43, 4294901760
    %v457 = vsub.f32 %v43, %v456
    %v458 = vand.u32 %v457, 4294901760
    %459 = vmatpush1.msra.mxu0 %v458
    %v460 = vand.u32 %v42, 4294901760
    %v461 = vsub.f32 %v42, %v460
    %v462 = vand.u32 %v461, 4294901760
    %463 = vmatprep.subr.mxu0 %v462
    %v464 = vand.u32 %v41, 4294901760
    %v465 = vsub.f32 %v41, %v464
    %v466 = vand.u32 %v465, 4294901760
    %467 = vmatpush1.msra.mxu0 %v466
    %v468 = vand.u32 %v40, 4294901760
    %v469 = vsub.f32 %v40, %v468
    %v470 = vand.u32 %v469, 4294901760
    %471 = vmatprep.subr.mxu0 %v470
    %v472 = vand.u32 %v39, 4294901760
    %v473 = vsub.f32 %v39, %v472
    %v474 = vand.u32 %v473, 4294901760
    %475 = vmatpush1.msra.mxu0 %v474
    %v476 = vand.u32 %v38, 4294901760
    %v477 = vsub.f32 %v38, %v476
    %v478 = vand.u32 %v477, 4294901760
    %479 = vmatprep.subr.mxu0 %v478
    %v480 = vand.u32 %v37, 4294901760
    %v481 = vsub.f32 %v37, %v480
    %v482 = vand.u32 %v481, 4294901760
    %483 = vmatpush1.msra.mxu0 %v482
    %484 = vmatprep.subr.mxu0 0.0
    %485 = vmatpush2.msra.mxu0 0.0
    %486 = vmatprep.subr.mxu0 0.0
    %487 = vmatpush2.msra.mxu0 0.0
    %488 = vmatprep.subr.mxu0 0.0
    %489 = vmatpush2.msra.mxu0 0.0
    %490 = vmatprep.subr.mxu0 0.0
    %491 = vmatpush2.msra.mxu0 0.0
    %492 = vmatprep.subr.mxu0 0.0
    %493 = vmatpush2.msra.mxu0 0.0
    %494 = vmatprep.subr.mxu0 0.0
    %495 = vmatpush2.msra.mxu0 0.0
    %496 = vmatprep.subr.mxu0 0.0
    %497 = vmatpush2.msra.mxu0 0.0
    %498 = vmatprep.subr.mxu0 0.0
    %499 = vmatpush2.msra.mxu0 0.0
    %500 = vmatprep.subr.mxu0 0.0
    %501 = vmatpush2.msra.mxu0 0.0
    %502 = vmatprep.subr.mxu0 0.0
    %503 = vmatpush2.msra.mxu0 0.0
    %504 = vmatprep.subr.mxu0 0.0
    %505 = vmatpush2.msra.mxu0 0.0
    %506 = vmatprep.subr.mxu0 0.0
    %507 = vmatpush2.msra.mxu0 0.0
    %508 = vmatprep.subr.mxu0 0.0
    %509 = vmatpush2.msra.mxu0 0.0
    %510 = vmatprep.subr.mxu0 0.0
    %511 = vmatpush2.msra.mxu0 0.0
    %512 = vmatprep.subr.mxu0 0.0
    %513 = vmatpush2.msra.mxu0 0.0
    %514 = vmatprep.subr.mxu0 0.0
    %515 = vmatpush2.msra.mxu0 0.0
    %516 = vmatprep.mubr.f32.mxu0 0.0
    %v517 = vand.u32 %v59, 4294901760
    %518 = vmatmul.mubr.f32.gmra.mxu0 %v517
    %v519 = vpop.f32.mrf.mxu0
    %v520 = vadd.f32 %v424, %v519
    %v521 = vpop.f32.mrf.mxu0
    %v522 = vadd.f32 %v426, %v521
    %523 = vdwg.mxu0
    %524 = vmatprep.subr.mxu0 0.0
    %525 = vmatpush1.msra.mxu0 0.0
    %526 = vmatprep.subr.mxu0 0.0
    %527 = vmatpush1.msra.mxu0 0.0
    %528 = vmatprep.subr.mxu0 0.0
    %529 = vmatpush1.msra.mxu0 0.0
    %530 = vmatprep.subr.mxu0 0.0
    %531 = vmatpush1.msra.mxu0 0.0
    %532 = vmatprep.subr.mxu0 0.0
    %533 = vmatpush1.msra.mxu0 0.0
    %534 = vmatprep.subr.mxu0 0.0
    %535 = vmatpush1.msra.mxu0 0.0
    %536 = vmatprep.subr.mxu0 0.0
    %537 = vmatpush1.msra.mxu0 0.0
    %538 = vmatprep.subr.mxu0 0.0
    %539 = vmatpush1.msra.mxu0 0.0
    %540 = vmatprep.subr.mxu0 0.0
    %541 = vmatpush1.msra.mxu0 0.0
    %542 = vmatprep.subr.mxu0 0.0
    %543 = vmatpush1.msra.mxu0 0.0
    %544 = vmatprep.subr.mxu0 0.0
    %545 = vmatpush1.msra.mxu0 0.0
    %546 = vmatprep.subr.mxu0 0.0
    %547 = vmatpush1.msra.mxu0 0.0
    %v548 = vand.u32 %v44, 4294901760
    %549 = vmatprep.subr.mxu0 %v548
    %v550 = vand.u32 %v43, 4294901760
    %551 = vmatpush1.msra.mxu0 %v550
    %v552 = vand.u32 %v42, 4294901760
    %553 = vmatprep.subr.mxu0 %v552
    %v554 = vand.u32 %v41, 4294901760
    %555 = vmatpush1.msra.mxu0 %v554
    %v556 = vand.u32 %v40, 4294901760
    %557 = vmatprep.subr.mxu0 %v556
    %v558 = vand.u32 %v39, 4294901760
    %559 = vmatpush1.msra.mxu0 %v558
    %v560 = vand.u32 %v38, 4294901760
    %561 = vmatprep.subr.mxu0 %v560
    %v562 = vand.u32 %v37, 4294901760
    %563 = vmatpush1.msra.mxu0 %v562
    %564 = vmatprep.subr.mxu0 0.0
    %565 = vmatpush2.msra.mxu0 0.0
    %566 = vmatprep.subr.mxu0 0.0
    %567 = vmatpush2.msra.mxu0 0.0
    %568 = vmatprep.subr.mxu0 0.0
    %569 = vmatpush2.msra.mxu0 0.0
    %570 = vmatprep.subr.mxu0 0.0
    %571 = vmatpush2.msra.mxu0 0.0
    %572 = vmatprep.subr.mxu0 0.0
    %573 = vmatpush2.msra.mxu0 0.0
    %574 = vmatprep.subr.mxu0 0.0
    %575 = vmatpush2.msra.mxu0 0.0
    %576 = vmatprep.subr.mxu0 0.0
    %577 = vmatpush2.msra.mxu0 0.0
    %578 = vmatprep.subr.mxu0 0.0
    %579 = vmatpush2.msra.mxu0 0.0
    %580 = vmatprep.subr.mxu0 0.0
    %581 = vmatpush2.msra.mxu0 0.0
    %582 = vmatprep.subr.mxu0 0.0
    %583 = vmatpush2.msra.mxu0 0.0
    %584 = vmatprep.subr.mxu0 0.0
    %585 = vmatpush2.msra.mxu0 0.0
    %586 = vmatprep.subr.mxu0 0.0
    %587 = vmatpush2.msra.mxu0 0.0
    %588 = vmatprep.subr.mxu0 0.0
    %589 = vmatpush2.msra.mxu0 0.0
    %590 = vmatprep.subr.mxu0 0.0
    %591 = vmatpush2.msra.mxu0 0.0
    %592 = vmatprep.subr.mxu0 0.0
    %593 = vmatpush2.msra.mxu0 0.0
    %594 = vmatprep.subr.mxu0 0.0
    %595 = vmatpush2.msra.mxu0 0.0
    %596 = vmatprep.mubr.f32.mxu0 0.0
    %v597 = vand.u32 %v59, 4294901760
    %598 = vmatmul.mubr.f32.gmra.mxu0 %v597
    %v599 = vpop.f32.mrf.mxu0
    %v600 = vadd.f32 %v520, %v599
    %v601 = vpop.f32.mrf.mxu0
    %v602 = vadd.f32 %v522, %v601
    %603 = vdwg.mxu0
    %v604 = vmax.f32 %v600, 0.0
    %v605 = vmax.f32 %v602, 0.0
    %v606 = vld [vmem:[%s3] sm:$0xff]
    %v607 = vld [vmem:[%s3 + $0x8] sm:$0xff]
    %v608 = vld [vmem:[%s3 + $0x10] sm:$0xff]
    %v609 = vld [vmem:[%s3 + $0x18] sm:$0xff]
    %v610 = vld [vmem:[%s3 + $0x20] sm:$0xff]
    %v611 = vld [vmem:[%s3 + $0x28] sm:$0xff]
    %v612 = vld [vmem:[%s3 + $0x30] sm:$0xff]
    %v613 = vld [vmem:[%s3 + $0x38] sm:$0xff]
    %v614 = vld [vmem:[%s3 + $0x40] sm:$0xff]
    %v615 = vld [vmem:[%s3 + $0x48] sm:$0xff]
    %v616 = vld [vmem:[%s3 + $0x50] sm:$0xff]
    %v617 = vld [vmem:[%s3 + $0x58] sm:$0xff]
    %v618 = vld [vmem:[%s3 + $0x60] sm:$0xff]
    %v619 = vld [vmem:[%s3 + $0x68] sm:$0xff]
    %v620 = vld [vmem:[%s3 + $0x70] sm:$0xff]
    %v621 = vld [vmem:[%s3 + $0x78] sm:$0xff]
    %v622 = vld [vmem:[%s3 + $0x80] sm:$0xff]
    %v623 = vld [vmem:[%s3 + $0x88] sm:$0xff]
    %v624 = vld [vmem:[%s3 + $0x90] sm:$0xff]
    %v625 = vld [vmem:[%s3 + $0x98] sm:$0xff]
    %v626 = vld [vmem:[%s3 + $0xa0] sm:$0xff]
    %v627 = vld [vmem:[%s3 + $0xa8] sm:$0xff]
    %v628 = vld [vmem:[%s3 + $0xb0] sm:$0xff]
    %v629 = vld [vmem:[%s3 + $0xb8] sm:$0xff]
    %v630 = vld [vmem:[%s3 + $0xc0] sm:$0xff]
    %v631 = vld [vmem:[%s3 + $0xc8] sm:$0xff]
    %v632 = vld [vmem:[%s3 + $0xd0] sm:$0xff]
    %v633 = vld [vmem:[%s3 + $0xd8] sm:$0xff]
    %v634 = vld [vmem:[%s3 + $0xe0] sm:$0xff]
    %v635 = vld [vmem:[%s3 + $0xe8] sm:$0xff]
    %v636 = vld [vmem:[%s3 + $0xf0] sm:$0xff]
    %v637 = vld [vmem:[%s3 + $0xf8] sm:$0xff]
    %v638 = vld [vmem:[%s4] sm:$0x1]
    %v640 = vlaneseq
    %v641 = vshrl.u32 %v640, 7
    %v642 = vsub.s32 0, %v641
    %v643 = vrot.slane %v638, %v642
    %645 = vmatprep.subr.mxu0 0.0
    %v646 = vand.u32 %v621, 4294901760
    %647 = vmatpush1.msra.mxu0 %v646
    %648 = vmatprep.subr.mxu0 0.0
    %v649 = vand.u32 %v620, 4294901760
    %650 = vmatpush1.msra.mxu0 %v649
    %651 = vmatprep.subr.mxu0 0.0
    %v652 = vand.u32 %v619, 4294901760
    %653 = vmatpush1.msra.mxu0 %v652
    %654 = vmatprep.subr.mxu0 0.0
    %v655 = vand.u32 %v618, 4294901760
    %656 = vmatpush1.msra.mxu0 %v655
    %657 = vmatprep.subr.mxu0 0.0
    %v658 = vand.u32 %v617, 4294901760
    %659 = vmatpush1.msra.mxu0 %v658
    %660 = vmatprep.subr.mxu0 0.0
    %v661 = vand.u32 %v616, 4294901760
    %662 = vmatpush1.msra.mxu0 %v661
    %663 = vmatprep.subr.mxu0 0.0
    %v664 = vand.u32 %v615, 4294901760
    %665 = vmatpush1.msra.mxu0 %v664
    %666 = vmatprep.subr.mxu0 0.0
    %v667 = vand.u32 %v614, 4294901760
    %668 = vmatpush1.msra.mxu0 %v667
    %669 = vmatprep.subr.mxu0 0.0
    %v670 = vand.u32 %v613, 4294901760
    %671 = vmatpush1.msra.mxu0 %v670
    %672 = vmatprep.subr.mxu0 0.0
    %v673 = vand.u32 %v612, 4294901760
    %674 = vmatpush1.msra.mxu0 %v673
    %675 = vmatprep.subr.mxu0 0.0
    %v676 = vand.u32 %v611, 4294901760
    %677 = vmatpush1.msra.mxu0 %v676
    %678 = vmatprep.subr.mxu0 0.0
    %v679 = vand.u32 %v610, 4294901760
    %680 = vmatpush1.msra.mxu0 %v679
    %681 = vmatprep.subr.mxu0 0.0
    %v682 = vand.u32 %v609, 4294901760
    %683 = vmatpush1.msra.mxu0 %v682
    %684 = vmatprep.subr.mxu0 0.0
    %v685 = vand.u32 %v608, 4294901760
    %686 = vmatpush1.msra.mxu0 %v685
    %687 = vmatprep.subr.mxu0 0.0
    %v688 = vand.u32 %v607, 4294901760
    %689 = vmatpush1.msra.mxu0 %v688
    %690 = vmatprep.subr.mxu0 0.0
    %v691 = vand.u32 %v606, 4294901760
    %692 = vmatpush1.msra.mxu0 %v691
    %693 = vmatprep.subr.mxu0 0.0
    %v694 = vand.u32 %v637, 4294901760
    %695 = vmatpush2.msra.mxu0 %v694
    %696 = vmatprep.subr.mxu0 0.0
    %v697 = vand.u32 %v636, 4294901760
    %698 = vmatpush2.msra.mxu0 %v697
    %699 = vmatprep.subr.mxu0 0.0
    %v700 = vand.u32 %v635, 4294901760
    %701 = vmatpush2.msra.mxu0 %v700
    %702 = vmatprep.subr.mxu0 0.0
    %v703 = vand.u32 %v634, 4294901760
    %704 = vmatpush2.msra.mxu0 %v703
    %705 = vmatprep.subr.mxu0 0.0
    %v706 = vand.u32 %v633, 4294901760
    %707 = vmatpush2.msra.mxu0 %v706
    %708 = vmatprep.subr.mxu0 0.0
    %v709 = vand.u32 %v632, 4294901760
    %710 = vmatpush2.msra.mxu0 %v709
    %711 = vmatprep.subr.mxu0 0.0
    %v712 = vand.u32 %v631, 4294901760
    %713 = vmatpush2.msra.mxu0 %v712
    %714 = vmatprep.subr.mxu0 0.0
    %v715 = vand.u32 %v630, 4294901760
    %716 = vmatpush2.msra.mxu0 %v715
    %717 = vmatprep.subr.mxu0 0.0
    %v718 = vand.u32 %v629, 4294901760
    %719 = vmatpush2.msra.mxu0 %v718
    %720 = vmatprep.subr.mxu0 0.0
    %v721 = vand.u32 %v628, 4294901760
    %722 = vmatpush2.msra.mxu0 %v721
    %723 = vmatprep.subr.mxu0 0.0
    %v724 = vand.u32 %v627, 4294901760
    %725 = vmatpush2.msra.mxu0 %v724
    %726 = vmatprep.subr.mxu0 0.0
    %v727 = vand.u32 %v626, 4294901760
    %728 = vmatpush2.msra.mxu0 %v727
    %729 = vmatprep.subr.mxu0 0.0
    %v730 = vand.u32 %v625, 4294901760
    %731 = vmatpush2.msra.mxu0 %v730
    %732 = vmatprep.subr.mxu0 0.0
    %v733 = vand.u32 %v624, 4294901760
    %734 = vmatpush2.msra.mxu0 %v733
    %735 = vmatprep.subr.mxu0 0.0
    %v736 = vand.u32 %v623, 4294901760
    %737 = vmatpush2.msra.mxu0 %v736
    %738 = vmatprep.subr.mxu0 0.0
    %v739 = vand.u32 %v622, 4294901760
    %740 = vmatpush2.msra.mxu0 %v739
    %v741 = vand.u32 %v605, 4294901760
    %v742 = vsub.f32 %v605, %v741
    %v743 = vand.u32 %v742, 4294901760
    %v744 = vsub.f32 %v742, %v743
    %v745 = vand.u32 %v744, 4294901760
    %746 = vmatprep.mubr.f32.mxu0 %v745
    %v747 = vand.u32 %v604, 4294901760
    %v748 = vsub.f32 %v604, %v747
    %v749 = vand.u32 %v748, 4294901760
    %v750 = vsub.f32 %v748, %v749
    %v751 = vand.u32 %v750, 4294901760
    %752 = vmatmul.mubr.f32.gmra.mxu0 %v751
    %v753 = vpop.f32.mrf.mxu0
    %v754 = vadd.f32 %v643, %v753
    %v755 = vpop.f32.mrf.mxu0
    %756 = vdwg.mxu0
    %757 = vmatprep.subr.mxu0 0.0
    %v758 = vand.u32 %v621, 4294901760
    %v759 = vsub.f32 %v621, %v758
    %v760 = vand.u32 %v759, 4294901760
    %v761 = vsub.f32 %v759, %v760
    %v762 = vand.u32 %v761, 4294901760
    %763 = vmatpush1.msra.mxu0 %v762
    %764 = vmatprep.subr.mxu0 0.0
    %v765 = vand.u32 %v620, 4294901760
    %v766 = vsub.f32 %v620, %v765
    %v767 = vand.u32 %v766, 4294901760
    %v768 = vsub.f32 %v766, %v767
    %v769 = vand.u32 %v768, 4294901760
    %770 = vmatpush1.msra.mxu0 %v769
    %771 = vmatprep.subr.mxu0 0.0
    %v772 = vand.u32 %v619, 4294901760
    %v773 = vsub.f32 %v619, %v772
    %v774 = vand.u32 %v773, 4294901760
    %v775 = vsub.f32 %v773, %v774
    %v776 = vand.u32 %v775, 4294901760
    %777 = vmatpush1.msra.mxu0 %v776
    %778 = vmatprep.subr.mxu0 0.0
    %v779 = vand.u32 %v618, 4294901760
    %v780 = vsub.f32 %v618, %v779
    %v781 = vand.u32 %v780, 4294901760
    %v782 = vsub.f32 %v780, %v781
    %v783 = vand.u32 %v782, 4294901760
    %784 = vmatpush1.msra.mxu0 %v783
    %785 = vmatprep.subr.mxu0 0.0
    %v786 = vand.u32 %v617, 4294901760
    %v787 = vsub.f32 %v617, %v786
    %v788 = vand.u32 %v787, 4294901760
    %v789 = vsub.f32 %v787, %v788
    %v790 = vand.u32 %v789, 4294901760
    %791 = vmatpush1.msra.mxu0 %v790
    %792 = vmatprep.subr.mxu0 0.0
    %v793 = vand.u32 %v616, 4294901760
    %v794 = vsub.f32 %v616, %v793
    %v795 = vand.u32 %v794, 4294901760
    %v796 = vsub.f32 %v794, %v795
    %v797 = vand.u32 %v796, 4294901760
    %798 = vmatpush1.msra.mxu0 %v797
    %799 = vmatprep.subr.mxu0 0.0
    %v800 = vand.u32 %v615, 4294901760
    %v801 = vsub.f32 %v615, %v800
    %v802 = vand.u32 %v801, 4294901760
    %v803 = vsub.f32 %v801, %v802
    %v804 = vand.u32 %v803, 4294901760
    %805 = vmatpush1.msra.mxu0 %v804
    %806 = vmatprep.subr.mxu0 0.0
    %v807 = vand.u32 %v614, 4294901760
    %v808 = vsub.f32 %v614, %v807
    %v809 = vand.u32 %v808, 4294901760
    %v810 = vsub.f32 %v808, %v809
    %v811 = vand.u32 %v810, 4294901760
    %812 = vmatpush1.msra.mxu0 %v811
    %813 = vmatprep.subr.mxu0 0.0
    %v814 = vand.u32 %v613, 4294901760
    %v815 = vsub.f32 %v613, %v814
    %v816 = vand.u32 %v815, 4294901760
    %v817 = vsub.f32 %v815, %v816
    %v818 = vand.u32 %v817, 4294901760
    %819 = vmatpush1.msra.mxu0 %v818
    %820 = vmatprep.subr.mxu0 0.0
    %v821 = vand.u32 %v612, 4294901760
    %v822 = vsub.f32 %v612, %v821
    %v823 = vand.u32 %v822, 4294901760
    %v824 = vsub.f32 %v822, %v823
    %v825 = vand.u32 %v824, 4294901760
    %826 = vmatpush1.msra.mxu0 %v825
    %827 = vmatprep.subr.mxu0 0.0
    %v828 = vand.u32 %v611, 4294901760
    %v829 = vsub.f32 %v611, %v828
    %v830 = vand.u32 %v829, 4294901760
    %v831 = vsub.f32 %v829, %v830
    %v832 = vand.u32 %v831, 4294901760
    %833 = vmatpush1.msra.mxu0 %v832
    %834 = vmatprep.subr.mxu0 0.0
    %v835 = vand.u32 %v610, 4294901760
    %v836 = vsub.f32 %v610, %v835
    %v837 = vand.u32 %v836, 4294901760
    %v838 = vsub.f32 %v836, %v837
    %v839 = vand.u32 %v838, 4294901760
    %840 = vmatpush1.msra.mxu0 %v839
    %841 = vmatprep.subr.mxu0 0.0
    %v842 = vand.u32 %v609, 4294901760
    %v843 = vsub.f32 %v609, %v842
    %v844 = vand.u32 %v843, 4294901760
    %v845 = vsub.f32 %v843, %v844
    %v846 = vand.u32 %v845, 4294901760
    %847 = vmatpush1.msra.mxu0 %v846
    %848 = vmatprep.subr.mxu0 0.0
    %v849 = vand.u32 %v608, 4294901760
    %v850 = vsub.f32 %v608, %v849
    %v851 = vand.u32 %v850, 4294901760
    %v852 = vsub.f32 %v850, %v851
    %v853 = vand.u32 %v852, 4294901760
    %854 = vmatpush1.msra.mxu0 %v853
    %855 = vmatprep.subr.mxu0 0.0
    %v856 = vand.u32 %v607, 4294901760
    %v857 = vsub.f32 %v607, %v856
    %v858 = vand.u32 %v857, 4294901760
    %v859 = vsub.f32 %v857, %v858
    %v860 = vand.u32 %v859, 4294901760
    %861 = vmatpush1.msra.mxu0 %v860
    %862 = vmatprep.subr.mxu0 0.0
    %v863 = vand.u32 %v606, 4294901760
    %v864 = vsub.f32 %v606, %v863
    %v865 = vand.u32 %v864, 4294901760
    %v866 = vsub.f32 %v864, %v865
    %v867 = vand.u32 %v866, 4294901760
    %868 = vmatpush1.msra.mxu0 %v867
    %869 = vmatprep.subr.mxu0 0.0
    %v870 = vand.u32 %v637, 4294901760
    %v871 = vsub.f32 %v637, %v870
    %v872 = vand.u32 %v871, 4294901760
    %v873 = vsub.f32 %v871, %v872
    %v874 = vand.u32 %v873, 4294901760
    %875 = vmatpush2.msra.mxu0 %v874
    %876 = vmatprep.subr.mxu0 0.0
    %v877 = vand.u32 %v636, 4294901760
    %v878 = vsub.f32 %v636, %v877
    %v879 = vand.u32 %v878, 4294901760
    %v880 = vsub.f32 %v878, %v879
    %v881 = vand.u32 %v880, 4294901760
    %882 = vmatpush2.msra.mxu0 %v881
    %883 = vmatprep.subr.mxu0 0.0
    %v884 = vand.u32 %v635, 4294901760
    %v885 = vsub.f32 %v635, %v884
    %v886 = vand.u32 %v885, 4294901760
    %v887 = vsub.f32 %v885, %v886
    %v888 = vand.u32 %v887, 4294901760
    %889 = vmatpush2.msra.mxu0 %v888
    %890 = vmatprep.subr.mxu0 0.0
    %v891 = vand.u32 %v634, 4294901760
    %v892 = vsub.f32 %v634, %v891
    %v893 = vand.u32 %v892, 4294901760
    %v894 = vsub.f32 %v892, %v893
    %v895 = vand.u32 %v894, 4294901760
    %896 = vmatpush2.msra.mxu0 %v895
    %897 = vmatprep.subr.mxu0 0.0
    %v898 = vand.u32 %v633, 4294901760
    %v899 = vsub.f32 %v633, %v898
    %v900 = vand.u32 %v899, 4294901760
    %v901 = vsub.f32 %v899, %v900
    %v902 = vand.u32 %v901, 4294901760
    %903 = vmatpush2.msra.mxu0 %v902
    %904 = vmatprep.subr.mxu0 0.0
    %v905 = vand.u32 %v632, 4294901760
    %v906 = vsub.f32 %v632, %v905
    %v907 = vand.u32 %v906, 4294901760
    %v908 = vsub.f32 %v906, %v907
    %v909 = vand.u32 %v908, 4294901760
    %910 = vmatpush2.msra.mxu0 %v909
    %911 = vmatprep.subr.mxu0 0.0
    %v912 = vand.u32 %v631, 4294901760
    %v913 = vsub.f32 %v631, %v912
    %v914 = vand.u32 %v913, 4294901760
    %v915 = vsub.f32 %v913, %v914
    %v916 = vand.u32 %v915, 4294901760
    %917 = vmatpush2.msra.mxu0 %v916
    %918 = vmatprep.subr.mxu0 0.0
    %v919 = vand.u32 %v630, 4294901760
    %v920 = vsub.f32 %v630, %v919
    %v921 = vand.u32 %v920, 4294901760
    %v922 = vsub.f32 %v920, %v921
    %v923 = vand.u32 %v922, 4294901760
    %924 = vmatpush2.msra.mxu0 %v923
    %925 = vmatprep.subr.mxu0 0.0
    %v926 = vand.u32 %v629, 4294901760
    %v927 = vsub.f32 %v629, %v926
    %v928 = vand.u32 %v927, 4294901760
    %v929 = vsub.f32 %v927, %v928
    %v930 = vand.u32 %v929, 4294901760
    %931 = vmatpush2.msra.mxu0 %v930
    %932 = vmatprep.subr.mxu0 0.0
    %v933 = vand.u32 %v628, 4294901760
    %v934 = vsub.f32 %v628, %v933
    %v935 = vand.u32 %v934, 4294901760
    %v936 = vsub.f32 %v934, %v935
    %v937 = vand.u32 %v936, 4294901760
    %938 = vmatpush2.msra.mxu0 %v937
    %939 = vmatprep.subr.mxu0 0.0
    %v940 = vand.u32 %v627, 4294901760
    %v941 = vsub.f32 %v627, %v940
    %v942 = vand.u32 %v941, 4294901760
    %v943 = vsub.f32 %v941, %v942
    %v944 = vand.u32 %v943, 4294901760
    %945 = vmatpush2.msra.mxu0 %v944
    %946 = vmatprep.subr.mxu0 0.0
    %v947 = vand.u32 %v626, 4294901760
    %v948 = vsub.f32 %v626, %v947
    %v949 = vand.u32 %v948, 4294901760
    %v950 = vsub.f32 %v948, %v949
    %v951 = vand.u32 %v950, 4294901760
    %952 = vmatpush2.msra.mxu0 %v951
    %953 = vmatprep.subr.mxu0 0.0
    %v954 = vand.u32 %v625, 4294901760
    %v955 = vsub.f32 %v625, %v954
    %v956 = vand.u32 %v955, 4294901760
    %v957 = vsub.f32 %v955, %v956
    %v958 = vand.u32 %v957, 4294901760
    %959 = vmatpush2.msra.mxu0 %v958
    %960 = vmatprep.subr.mxu0 0.0
    %v961 = vand.u32 %v624, 4294901760
    %v962 = vsub.f32 %v624, %v961
    %v963 = vand.u32 %v962, 4294901760
    %v964 = vsub.f32 %v962, %v963
    %v965 = vand.u32 %v964, 4294901760
    %966 = vmatpush2.msra.mxu0 %v965
    %967 = vmatprep.subr.mxu0 0.0
    %v968 = vand.u32 %v623, 4294901760
    %v969 = vsub.f32 %v623, %v968
    %v970 = vand.u32 %v969, 4294901760
    %v971 = vsub.f32 %v969, %v970
    %v972 = vand.u32 %v971, 4294901760
    %973 = vmatpush2.msra.mxu0 %v972
    %974 = vmatprep.subr.mxu0 0.0
    %v975 = vand.u32 %v622, 4294901760
    %v976 = vsub.f32 %v622, %v975
    %v977 = vand.u32 %v976, 4294901760
    %v978 = vsub.f32 %v976, %v977
    %v979 = vand.u32 %v978, 4294901760
    %980 = vmatpush2.msra.mxu0 %v979
    %v981 = vand.u32 %v605, 4294901760
    %982 = vmatprep.mubr.f32.mxu0 %v981
    %v983 = vand.u32 %v604, 4294901760
    %984 = vmatmul.mubr.f32.gmra.mxu0 %v983
    %v985 = vpop.f32.mrf.mxu0
    %v986 = vadd.f32 %v754, %v985
    %v987 = vpop.f32.mrf.mxu0
    %988 = vdwg.mxu0
    %989 = vmatprep.subr.mxu0 0.0
    %v990 = vand.u32 %v621, 4294901760
    %v991 = vsub.f32 %v621, %v990
    %992 = vmatpush1.msra.mxu0 %v991
    %993 = vmatprep.subr.mxu0 0.0
    %v994 = vand.u32 %v620, 4294901760
    %v995 = vsub.f32 %v620, %v994
    %996 = vmatpush1.msra.mxu0 %v995
    %997 = vmatprep.subr.mxu0 0.0
    %v998 = vand.u32 %v619, 4294901760
    %v999 = vsub.f32 %v619, %v998
    %1000 = vmatpush1.msra.mxu0 %v999
    %1001 = vmatprep.subr.mxu0 0.0
    %v1002 = vand.u32 %v618, 4294901760
    %v1003 = vsub.f32 %v618, %v1002
    %1004 = vmatpush1.msra.mxu0 %v1003
    %1005 = vmatprep.subr.mxu0 0.0
    %v1006 = vand.u32 %v617, 4294901760
    %v1007 = vsub.f32 %v617, %v1006
    %1008 = vmatpush1.msra.mxu0 %v1007
    %1009 = vmatprep.subr.mxu0 0.0
    %v1010 = vand.u32 %v616, 4294901760
    %v1011 = vsub.f32 %v616, %v1010
    %1012 = vmatpush1.msra.mxu0 %v1011
    %1013 = vmatprep.subr.mxu0 0.0
    %v1014 = vand.u32 %v615, 4294901760
    %v1015 = vsub.f32 %v615, %v1014
    %1016 = vmatpush1.msra.mxu0 %v1015
    %1017 = vmatprep.subr.mxu0 0.0
    %v1018 = vand.u32 %v614, 4294901760
    %v1019 = vsub.f32 %v614, %v1018
    %1020 = vmatpush1.msra.mxu0 %v1019
    %1021 = vmatprep.subr.mxu0 0.0
    %v1022 = vand.u32 %v613, 4294901760
    %v1023 = vsub.f32 %v613, %v1022
    %1024 = vmatpush1.msra.mxu0 %v1023
    %1025 = vmatprep.subr.mxu0 0.0
    %v1026 = vand.u32 %v612, 4294901760
    %v1027 = vsub.f32 %v612, %v1026
    %1028 = vmatpush1.msra.mxu0 %v1027
    %1029 = vmatprep.subr.mxu0 0.0
    %v1030 = vand.u32 %v611, 4294901760
    %v1031 = vsub.f32 %v611, %v1030
    %1032 = vmatpush1.msra.mxu0 %v1031
    %1033 = vmatprep.subr.mxu0 0.0
    %v1034 = vand.u32 %v610, 4294901760
    %v1035 = vsub.f32 %v610, %v1034
    %1036 = vmatpush1.msra.mxu0 %v1035
    %1037 = vmatprep.subr.mxu0 0.0
    %v1038 = vand.u32 %v609, 4294901760
    %v1039 = vsub.f32 %v609, %v1038
    %1040 = vmatpush1.msra.mxu0 %v1039
    %1041 = vmatprep.subr.mxu0 0.0
    %v1042 = vand.u32 %v608, 4294901760
    %v1043 = vsub.f32 %v608, %v1042
    %1044 = vmatpush1.msra.mxu0 %v1043
    %1045 = vmatprep.subr.mxu0 0.0
    %v1046 = vand.u32 %v607, 4294901760
    %v1047 = vsub.f32 %v607, %v1046
    %1048 = vmatpush1.msra.mxu0 %v1047
    %1049 = vmatprep.subr.mxu0 0.0
    %v1050 = vand.u32 %v606, 4294901760
    %v1051 = vsub.f32 %v606, %v1050
    %1052 = vmatpush1.msra.mxu0 %v1051
    %1053 = vmatprep.subr.mxu0 0.0
    %v1054 = vand.u32 %v637, 4294901760
    %v1055 = vsub.f32 %v637, %v1054
    %1056 = vmatpush2.msra.mxu0 %v1055
    %1057 = vmatprep.subr.mxu0 0.0
    %v1058 = vand.u32 %v636, 4294901760
    %v1059 = vsub.f32 %v636, %v1058
    %1060 = vmatpush2.msra.mxu0 %v1059
    %1061 = vmatprep.subr.mxu0 0.0
    %v1062 = vand.u32 %v635, 4294901760
    %v1063 = vsub.f32 %v635, %v1062
    %1064 = vmatpush2.msra.mxu0 %v1063
    %1065 = vmatprep.subr.mxu0 0.0
    %v1066 = vand.u32 %v634, 4294901760
    %v1067 = vsub.f32 %v634, %v1066
    %1068 = vmatpush2.msra.mxu0 %v1067
    %1069 = vmatprep.subr.mxu0 0.0
    %v1070 = vand.u32 %v633, 4294901760
    %v1071 = vsub.f32 %v633, %v1070
    %1072 = vmatpush2.msra.mxu0 %v1071
    %1073 = vmatprep.subr.mxu0 0.0
    %v1074 = vand.u32 %v632, 4294901760
    %v1075 = vsub.f32 %v632, %v1074
    %1076 = vmatpush2.msra.mxu0 %v1075
    %1077 = vmatprep.subr.mxu0 0.0
    %v1078 = vand.u32 %v631, 4294901760
    %v1079 = vsub.f32 %v631, %v1078
    %1080 = vmatpush2.msra.mxu0 %v1079
    %1081 = vmatprep.subr.mxu0 0.0
    %v1082 = vand.u32 %v630, 4294901760
    %v1083 = vsub.f32 %v630, %v1082
    %1084 = vmatpush2.msra.mxu0 %v1083
    %1085 = vmatprep.subr.mxu0 0.0
    %v1086 = vand.u32 %v629, 4294901760
    %v1087 = vsub.f32 %v629, %v1086
    %1088 = vmatpush2.msra.mxu0 %v1087
    %1089 = vmatprep.subr.mxu0 0.0
    %v1090 = vand.u32 %v628, 4294901760
    %v1091 = vsub.f32 %v628, %v1090
    %1092 = vmatpush2.msra.mxu0 %v1091
    %1093 = vmatprep.subr.mxu0 0.0
    %v1094 = vand.u32 %v627, 4294901760
    %v1095 = vsub.f32 %v627, %v1094
    %1096 = vmatpush2.msra.mxu0 %v1095
    %1097 = vmatprep.subr.mxu0 0.0
    %v1098 = vand.u32 %v626, 4294901760
    %v1099 = vsub.f32 %v626, %v1098
    %1100 = vmatpush2.msra.mxu0 %v1099
    %1101 = vmatprep.subr.mxu0 0.0
    %v1102 = vand.u32 %v625, 4294901760
    %v1103 = vsub.f32 %v625, %v1102
    %1104 = vmatpush2.msra.mxu0 %v1103
    %1105 = vmatprep.subr.mxu0 0.0
    %v1106 = vand.u32 %v624, 4294901760
    %v1107 = vsub.f32 %v624, %v1106
    %1108 = vmatpush2.msra.mxu0 %v1107
    %1109 = vmatprep.subr.mxu0 0.0
    %v1110 = vand.u32 %v623, 4294901760
    %v1111 = vsub.f32 %v623, %v1110
    %1112 = vmatpush2.msra.mxu0 %v1111
    %1113 = vmatprep.subr.mxu0 0.0
    %v1114 = vand.u32 %v622, 4294901760
    %v1115 = vsub.f32 %v622, %v1114
    %1116 = vmatpush2.msra.mxu0 %v1115
    %v1117 = vand.u32 %v605, 4294901760
    %v1118 = vsub.f32 %v605, %v1117
    %1119 = vmatprep.mubr.f32.mxu0 %v1118
    %v1120 = vand.u32 %v604, 4294901760
    %v1121 = vsub.f32 %v604, %v1120
    %1122 = vmatmul.mubr.f32.gmra.mxu0 %v1121
    %v1123 = vpop.f32.mrf.mxu0
    %v1124 = vadd.f32 %v986, %v1123
    %v1125 = vpop.f32.mrf.mxu0
    %1126 = vdwg.mxu0
    %1127 = vmatprep.subr.mxu0 0.0
    %v1128 = vand.u32 %v621, 4294901760
    %1129 = vmatpush1.msra.mxu0 %v1128
    %1130 = vmatprep.subr.mxu0 0.0
    %v1131 = vand.u32 %v620, 4294901760
    %1132 = vmatpush1.msra.mxu0 %v1131
    %1133 = vmatprep.subr.mxu0 0.0
    %v1134 = vand.u32 %v619, 4294901760
    %1135 = vmatpush1.msra.mxu0 %v1134
    %1136 = vmatprep.subr.mxu0 0.0
    %v1137 = vand.u32 %v618, 4294901760
    %1138 = vmatpush1.msra.mxu0 %v1137
    %1139 = vmatprep.subr.mxu0 0.0
    %v1140 = vand.u32 %v617, 4294901760
    %1141 = vmatpush1.msra.mxu0 %v1140
    %1142 = vmatprep.subr.mxu0 0.0
    %v1143 = vand.u32 %v616, 4294901760
    %1144 = vmatpush1.msra.mxu0 %v1143
    %1145 = vmatprep.subr.mxu0 0.0
    %v1146 = vand.u32 %v615, 4294901760
    %1147 = vmatpush1.msra.mxu0 %v1146
    %1148 = vmatprep.subr.mxu0 0.0
    %v1149 = vand.u32 %v614, 4294901760
    %1150 = vmatpush1.msra.mxu0 %v1149
    %1151 = vmatprep.subr.mxu0 0.0
    %v1152 = vand.u32 %v613, 4294901760
    %1153 = vmatpush1.msra.mxu0 %v1152
    %1154 = vmatprep.subr.mxu0 0.0
    %v1155 = vand.u32 %v612, 4294901760
    %1156 = vmatpush1.msra.mxu0 %v1155
    %1157 = vmatprep.subr.mxu0 0.0
    %v1158 = vand.u32 %v611, 4294901760
    %1159 = vmatpush1.msra.mxu0 %v1158
    %1160 = vmatprep.subr.mxu0 0.0
    %v1161 = vand.u32 %v610, 4294901760
    %1162 = vmatpush1.msra.mxu0 %v1161
    %1163 = vmatprep.subr.mxu0 0.0
    %v1164 = vand.u32 %v609, 4294901760
    %1165 = vmatpush1.msra.mxu0 %v1164
    %1166 = vmatprep.subr.mxu0 0.0
    %v1167 = vand.u32 %v608, 4294901760
    %1168 = vmatpush1.msra.mxu0 %v1167
    %1169 = vmatprep.subr.mxu0 0.0
    %v1170 = vand.u32 %v607, 4294901760
    %1171 = vmatpush1.msra.mxu0 %v1170
    %1172 = vmatprep.subr.mxu0 0.0
    %v1173 = vand.u32 %v606, 4294901760
    %1174 = vmatpush1.msra.mxu0 %v1173
    %1175 = vmatprep.subr.mxu0 0.0
    %v1176 = vand.u32 %v637, 4294901760
    %1177 = vmatpush2.msra.mxu0 %v1176
    %1178 = vmatprep.subr.mxu0 0.0
    %v1179 = vand.u32 %v636, 4294901760
    %1180 = vmatpush2.msra.mxu0 %v1179
    %1181 = vmatprep.subr.mxu0 0.0
    %v1182 = vand.u32 %v635, 4294901760
    %1183 = vmatpush2.msra.mxu0 %v1182
    %1184 = vmatprep.subr.mxu0 0.0
    %v1185 = vand.u32 %v634, 4294901760
    %1186 = vmatpush2.msra.mxu0 %v1185
    %1187 = vmatprep.subr.mxu0 0.0
    %v1188 = vand.u32 %v633, 4294901760
    %1189 = vmatpush2.msra.mxu0 %v1188
    %1190 = vmatprep.subr.mxu0 0.0
    %v1191 = vand.u32 %v632, 4294901760
    %1192 = vmatpush2.msra.mxu0 %v1191
    %1193 = vmatprep.subr.mxu0 0.0
    %v1194 = vand.u32 %v631, 4294901760
    %1195 = vmatpush2.msra.mxu0 %v1194
    %1196 = vmatprep.subr.mxu0 0.0
    %v1197 = vand.u32 %v630, 4294901760
    %1198 = vmatpush2.msra.mxu0 %v1197
    %1199 = vmatprep.subr.mxu0 0.0
    %v1200 = vand.u32 %v629, 4294901760
    %1201 = vmatpush2.msra.mxu0 %v1200
    %1202 = vmatprep.subr.mxu0 0.0
    %v1203 = vand.u32 %v628, 4294901760
    %1204 = vmatpush2.msra.mxu0 %v1203
    %1205 = vmatprep.subr.mxu0 0.0
    %v1206 = vand.u32 %v627, 4294901760
    %1207 = vmatpush2.msra.mxu0 %v1206
    %1208 = vmatprep.subr.mxu0 0.0
    %v1209 = vand.u32 %v626, 4294901760
    %1210 = vmatpush2.msra.mxu0 %v1209
    %1211 = vmatprep.subr.mxu0 0.0
    %v1212 = vand.u32 %v625, 4294901760
    %1213 = vmatpush2.msra.mxu0 %v1212
    %1214 = vmatprep.subr.mxu0 0.0
    %v1215 = vand.u32 %v624, 4294901760
    %1216 = vmatpush2.msra.mxu0 %v1215
    %1217 = vmatprep.subr.mxu0 0.0
    %v1218 = vand.u32 %v623, 4294901760
    %1219 = vmatpush2.msra.mxu0 %v1218
    %1220 = vmatprep.subr.mxu0 0.0
    %v1221 = vand.u32 %v622, 4294901760
    %1222 = vmatpush2.msra.mxu0 %v1221
    %v1223 = vand.u32 %v605, 4294901760
    %v1224 = vsub.f32 %v605, %v1223
    %v1225 = vand.u32 %v1224, 4294901760
    %1226 = vmatprep.mubr.f32.mxu0 %v1225
    %v1227 = vand.u32 %v604, 4294901760
    %v1228 = vsub.f32 %v604, %v1227
    %v1229 = vand.u32 %v1228, 4294901760
    %1230 = vmatmul.mubr.f32.gmra.mxu0 %v1229
    %v1231 = vpop.f32.mrf.mxu0
    %v1232 = vadd.f32 %v1124, %v1231
    %v1233 = vpop.f32.mrf.mxu0
    %1234 = vdwg.mxu0
    %1235 = vmatprep.subr.mxu0 0.0
    %v1236 = vand.u32 %v621, 4294901760
    %v1237 = vsub.f32 %v621, %v1236
    %v1238 = vand.u32 %v1237, 4294901760
    %1239 = vmatpush1.msra.mxu0 %v1238
    %1240 = vmatprep.subr.mxu0 0.0
    %v1241 = vand.u32 %v620, 4294901760
    %v1242 = vsub.f32 %v620, %v1241
    %v1243 = vand.u32 %v1242, 4294901760
    %1244 = vmatpush1.msra.mxu0 %v1243
    %1245 = vmatprep.subr.mxu0 0.0
    %v1246 = vand.u32 %v619, 4294901760
    %v1247 = vsub.f32 %v619, %v1246
    %v1248 = vand.u32 %v1247, 4294901760
    %1249 = vmatpush1.msra.mxu0 %v1248
    %1250 = vmatprep.subr.mxu0 0.0
    %v1251 = vand.u32 %v618, 4294901760
    %v1252 = vsub.f32 %v618, %v1251
    %v1253 = vand.u32 %v1252, 4294901760
    %1254 = vmatpush1.msra.mxu0 %v1253
    %1255 = vmatprep.subr.mxu0 0.0
    %v1256 = vand.u32 %v617, 4294901760
    %v1257 = vsub.f32 %v617, %v1256
    %v1258 = vand.u32 %v1257, 4294901760
    %1259 = vmatpush1.msra.mxu0 %v1258
    %1260 = vmatprep.subr.mxu0 0.0
    %v1261 = vand.u32 %v616, 4294901760
    %v1262 = vsub.f32 %v616, %v1261
    %v1263 = vand.u32 %v1262, 4294901760
    %1264 = vmatpush1.msra.mxu0 %v1263
    %1265 = vmatprep.subr.mxu0 0.0
    %v1266 = vand.u32 %v615, 4294901760
    %v1267 = vsub.f32 %v615, %v1266
    %v1268 = vand.u32 %v1267, 4294901760
    %1269 = vmatpush1.msra.mxu0 %v1268
    %1270 = vmatprep.subr.mxu0 0.0
    %v1271 = vand.u32 %v614, 4294901760
    %v1272 = vsub.f32 %v614, %v1271
    %v1273 = vand.u32 %v1272, 4294901760
    %1274 = vmatpush1.msra.mxu0 %v1273
    %1275 = vmatprep.subr.mxu0 0.0
    %v1276 = vand.u32 %v613, 4294901760
    %v1277 = vsub.f32 %v613, %v1276
    %v1278 = vand.u32 %v1277, 4294901760
    %1279 = vmatpush1.msra.mxu0 %v1278
    %1280 = vmatprep.subr.mxu0 0.0
    %v1281 = vand.u32 %v612, 4294901760
    %v1282 = vsub.f32 %v612, %v1281
    %v1283 = vand.u32 %v1282, 4294901760
    %1284 = vmatpush1.msra.mxu0 %v1283
    %1285 = vmatprep.subr.mxu0 0.0
    %v1286 = vand.u32 %v611, 4294901760
    %v1287 = vsub.f32 %v611, %v1286
    %v1288 = vand.u32 %v1287, 4294901760
    %1289 = vmatpush1.msra.mxu0 %v1288
    %1290 = vmatprep.subr.mxu0 0.0
    %v1291 = vand.u32 %v610, 4294901760
    %v1292 = vsub.f32 %v610, %v1291
    %v1293 = vand.u32 %v1292, 4294901760
    %1294 = vmatpush1.msra.mxu0 %v1293
    %1295 = vmatprep.subr.mxu0 0.0
    %v1296 = vand.u32 %v609, 4294901760
    %v1297 = vsub.f32 %v609, %v1296
    %v1298 = vand.u32 %v1297, 4294901760
    %1299 = vmatpush1.msra.mxu0 %v1298
    %1300 = vmatprep.subr.mxu0 0.0
    %v1301 = vand.u32 %v608, 4294901760
    %v1302 = vsub.f32 %v608, %v1301
    %v1303 = vand.u32 %v1302, 4294901760
    %1304 = vmatpush1.msra.mxu0 %v1303
    %1305 = vmatprep.subr.mxu0 0.0
    %v1306 = vand.u32 %v607, 4294901760
    %v1307 = vsub.f32 %v607, %v1306
    %v1308 = vand.u32 %v1307, 4294901760
    %1309 = vmatpush1.msra.mxu0 %v1308
    %1310 = vmatprep.subr.mxu0 0.0
    %v1311 = vand.u32 %v606, 4294901760
    %v1312 = vsub.f32 %v606, %v1311
    %v1313 = vand.u32 %v1312, 4294901760
    %1314 = vmatpush1.msra.mxu0 %v1313
    %1315 = vmatprep.subr.mxu0 0.0
    %v1316 = vand.u32 %v637, 4294901760
    %v1317 = vsub.f32 %v637, %v1316
    %v1318 = vand.u32 %v1317, 4294901760
    %1319 = vmatpush2.msra.mxu0 %v1318
    %1320 = vmatprep.subr.mxu0 0.0
    %v1321 = vand.u32 %v636, 4294901760
    %v1322 = vsub.f32 %v636, %v1321
    %v1323 = vand.u32 %v1322, 4294901760
    %1324 = vmatpush2.msra.mxu0 %v1323
    %1325 = vmatprep.subr.mxu0 0.0
    %v1326 = vand.u32 %v635, 4294901760
    %v1327 = vsub.f32 %v635, %v1326
    %v1328 = vand.u32 %v1327, 4294901760
    %1329 = vmatpush2.msra.mxu0 %v1328
    %1330 = vmatprep.subr.mxu0 0.0
    %v1331 = vand.u32 %v634, 4294901760
    %v1332 = vsub.f32 %v634, %v1331
    %v1333 = vand.u32 %v1332, 4294901760
    %1334 = vmatpush2.msra.mxu0 %v1333
    %1335 = vmatprep.subr.mxu0 0.0
    %v1336 = vand.u32 %v633, 4294901760
    %v1337 = vsub.f32 %v633, %v1336
    %v1338 = vand.u32 %v1337, 4294901760
    %1339 = vmatpush2.msra.mxu0 %v1338
    %1340 = vmatprep.subr.mxu0 0.0
    %v1341 = vand.u32 %v632, 4294901760
    %v1342 = vsub.f32 %v632, %v1341
    %v1343 = vand.u32 %v1342, 4294901760
    %1344 = vmatpush2.msra.mxu0 %v1343
    %1345 = vmatprep.subr.mxu0 0.0
    %v1346 = vand.u32 %v631, 4294901760
    %v1347 = vsub.f32 %v631, %v1346
    %v1348 = vand.u32 %v1347, 4294901760
    %1349 = vmatpush2.msra.mxu0 %v1348
    %1350 = vmatprep.subr.mxu0 0.0
    %v1351 = vand.u32 %v630, 4294901760
    %v1352 = vsub.f32 %v630, %v1351
    %v1353 = vand.u32 %v1352, 4294901760
    %1354 = vmatpush2.msra.mxu0 %v1353
    %1355 = vmatprep.subr.mxu0 0.0
    %v1356 = vand.u32 %v629, 4294901760
    %v1357 = vsub.f32 %v629, %v1356
    %v1358 = vand.u32 %v1357, 4294901760
    %1359 = vmatpush2.msra.mxu0 %v1358
    %1360 = vmatprep.subr.mxu0 0.0
    %v1361 = vand.u32 %v628, 4294901760
    %v1362 = vsub.f32 %v628, %v1361
    %v1363 = vand.u32 %v1362, 4294901760
    %1364 = vmatpush2.msra.mxu0 %v1363
    %1365 = vmatprep.subr.mxu0 0.0
    %v1366 = vand.u32 %v627, 4294901760
    %v1367 = vsub.f32 %v627, %v1366
    %v1368 = vand.u32 %v1367, 4294901760
    %1369 = vmatpush2.msra.mxu0 %v1368
    %1370 = vmatprep.subr.mxu0 0.0
    %v1371 = vand.u32 %v626, 4294901760
    %v1372 = vsub.f32 %v626, %v1371
    %v1373 = vand.u32 %v1372, 4294901760
    %1374 = vmatpush2.msra.mxu0 %v1373
    %1375 = vmatprep.subr.mxu0 0.0
    %v1376 = vand.u32 %v625, 4294901760
    %v1377 = vsub.f32 %v625, %v1376
    %v1378 = vand.u32 %v1377, 4294901760
    %1379 = vmatpush2.msra.mxu0 %v1378
    %1380 = vmatprep.subr.mxu0 0.0
    %v1381 = vand.u32 %v624, 4294901760
    %v1382 = vsub.f32 %v624, %v1381
    %v1383 = vand.u32 %v1382, 4294901760
    %1384 = vmatpush2.msra.mxu0 %v1383
    %1385 = vmatprep.subr.mxu0 0.0
    %v1386 = vand.u32 %v623, 4294901760
    %v1387 = vsub.f32 %v623, %v1386
    %v1388 = vand.u32 %v1387, 4294901760
    %1389 = vmatpush2.msra.mxu0 %v1388
    %1390 = vmatprep.subr.mxu0 0.0
    %v1391 = vand.u32 %v622, 4294901760
    %v1392 = vsub.f32 %v622, %v1391
    %v1393 = vand.u32 %v1392, 4294901760
    %1394 = vmatpush2.msra.mxu0 %v1393
    %v1395 = vand.u32 %v605, 4294901760
    %1396 = vmatprep.mubr.f32.mxu0 %v1395
    %v1397 = vand.u32 %v604, 4294901760
    %1398 = vmatmul.mubr.f32.gmra.mxu0 %v1397
    %v1399 = vpop.f32.mrf.mxu0
    %v1400 = vadd.f32 %v1232, %v1399
    %v1401 = vpop.f32.mrf.mxu0
    %1402 = vdwg.mxu0
    %1403 = vmatprep.subr.mxu0 0.0
    %v1404 = vand.u32 %v621, 4294901760
    %1405 = vmatpush1.msra.mxu0 %v1404
    %1406 = vmatprep.subr.mxu0 0.0
    %v1407 = vand.u32 %v620, 4294901760
    %1408 = vmatpush1.msra.mxu0 %v1407
    %1409 = vmatprep.subr.mxu0 0.0
    %v1410 = vand.u32 %v619, 4294901760
    %1411 = vmatpush1.msra.mxu0 %v1410
    %1412 = vmatprep.subr.mxu0 0.0
    %v1413 = vand.u32 %v618, 4294901760
    %1414 = vmatpush1.msra.mxu0 %v1413
    %1415 = vmatprep.subr.mxu0 0.0
    %v1416 = vand.u32 %v617, 4294901760
    %1417 = vmatpush1.msra.mxu0 %v1416
    %1418 = vmatprep.subr.mxu0 0.0
    %v1419 = vand.u32 %v616, 4294901760
    %1420 = vmatpush1.msra.mxu0 %v1419
    %1421 = vmatprep.subr.mxu0 0.0
    %v1422 = vand.u32 %v615, 4294901760
    %1423 = vmatpush1.msra.mxu0 %v1422
    %1424 = vmatprep.subr.mxu0 0.0
    %v1425 = vand.u32 %v614, 4294901760
    %1426 = vmatpush1.msra.mxu0 %v1425
    %1427 = vmatprep.subr.mxu0 0.0
    %v1428 = vand.u32 %v613, 4294901760
    %1429 = vmatpush1.msra.mxu0 %v1428
    %1430 = vmatprep.subr.mxu0 0.0
    %v1431 = vand.u32 %v612, 4294901760
    %1432 = vmatpush1.msra.mxu0 %v1431
    %1433 = vmatprep.subr.mxu0 0.0
    %v1434 = vand.u32 %v611, 4294901760
    %1435 = vmatpush1.msra.mxu0 %v1434
    %1436 = vmatprep.subr.mxu0 0.0
    %v1437 = vand.u32 %v610, 4294901760
    %1438 = vmatpush1.msra.mxu0 %v1437
    %1439 = vmatprep.subr.mxu0 0.0
    %v1440 = vand.u32 %v609, 4294901760
    %1441 = vmatpush1.msra.mxu0 %v1440
    %1442 = vmatprep.subr.mxu0 0.0
    %v1443 = vand.u32 %v608, 4294901760
    %1444 = vmatpush1.msra.mxu0 %v1443
    %1445 = vmatprep.subr.mxu0 0.0
    %v1446 = vand.u32 %v607, 4294901760
    %1447 = vmatpush1.msra.mxu0 %v1446
    %1448 = vmatprep.subr.mxu0 0.0
    %v1449 = vand.u32 %v606, 4294901760
    %1450 = vmatpush1.msra.mxu0 %v1449
    %1451 = vmatprep.subr.mxu0 0.0
    %v1452 = vand.u32 %v637, 4294901760
    %1453 = vmatpush2.msra.mxu0 %v1452
    %1454 = vmatprep.subr.mxu0 0.0
    %v1455 = vand.u32 %v636, 4294901760
    %1456 = vmatpush2.msra.mxu0 %v1455
    %1457 = vmatprep.subr.mxu0 0.0
    %v1458 = vand.u32 %v635, 4294901760
    %1459 = vmatpush2.msra.mxu0 %v1458
    %1460 = vmatprep.subr.mxu0 0.0
    %v1461 = vand.u32 %v634, 4294901760
    %1462 = vmatpush2.msra.mxu0 %v1461
    %1463 = vmatprep.subr.mxu0 0.0
    %v1464 = vand.u32 %v633, 4294901760
    %1465 = vmatpush2.msra.mxu0 %v1464
    %1466 = vmatprep.subr.mxu0 0.0
    %v1467 = vand.u32 %v632, 4294901760
    %1468 = vmatpush2.msra.mxu0 %v1467
    %1469 = vmatprep.subr.mxu0 0.0
    %v1470 = vand.u32 %v631, 4294901760
    %1471 = vmatpush2.msra.mxu0 %v1470
    %1472 = vmatprep.subr.mxu0 0.0
    %v1473 = vand.u32 %v630, 4294901760
    %1474 = vmatpush2.msra.mxu0 %v1473
    %1475 = vmatprep.subr.mxu0 0.0
    %v1476 = vand.u32 %v629, 4294901760
    %1477 = vmatpush2.msra.mxu0 %v1476
    %1478 = vmatprep.subr.mxu0 0.0
    %v1479 = vand.u32 %v628, 4294901760
    %1480 = vmatpush2.msra.mxu0 %v1479
    %1481 = vmatprep.subr.mxu0 0.0
    %v1482 = vand.u32 %v627, 4294901760
    %1483 = vmatpush2.msra.mxu0 %v1482
    %1484 = vmatprep.subr.mxu0 0.0
    %v1485 = vand.u32 %v626, 4294901760
    %1486 = vmatpush2.msra.mxu0 %v1485
    %1487 = vmatprep.subr.mxu0 0.0
    %v1488 = vand.u32 %v625, 4294901760
    %1489 = vmatpush2.msra.mxu0 %v1488
    %1490 = vmatprep.subr.mxu0 0.0
    %v1491 = vand.u32 %v624, 4294901760
    %1492 = vmatpush2.msra.mxu0 %v1491
    %1493 = vmatprep.subr.mxu0 0.0
    %v1494 = vand.u32 %v623, 4294901760
    %1495 = vmatpush2.msra.mxu0 %v1494
    %1496 = vmatprep.subr.mxu0 0.0
    %v1497 = vand.u32 %v622, 4294901760
    %1498 = vmatpush2.msra.mxu0 %v1497
    %v1499 = vand.u32 %v605, 4294901760
    %1500 = vmatprep.mubr.f32.mxu0 %v1499
    %v1501 = vand.u32 %v604, 4294901760
    %1502 = vmatmul.mubr.f32.gmra.mxu0 %v1501
    %v1503 = vpop.f32.mrf.mxu0
    %v1504 = vadd.f32 %v1400, %v1503
    %v1505 = vpop.f32.mrf.mxu0
    %1506 = vdwg.mxu0
    %vm1507 = vcmask 25600
    %1508 = vst.msk [vmem:[#allocation2] sm:$0x3] %vm1507, %v1504
    %v1509 = vld [vmem:[%s5] sm:$0xff]
    %v1510 = vld [vmem:[%s5 + $0x8] sm:$0xff]
    %v1511 = vld [vmem:[%s5 + $0x10] sm:$0xff]
    %v1512 = vld [vmem:[%s5 + $0x18] sm:$0xff]
    %v1513 = vld [vmem:[%s5 + $0x20] sm:$0xff]
    %v1514 = vld [vmem:[%s5 + $0x28] sm:$0xff]
    %v1515 = vld [vmem:[%s5 + $0x30] sm:$0xff]
    %v1516 = vld [vmem:[%s5 + $0x38] sm:$0xff]
    %v1517 = vld [vmem:[%s6] sm:$0x3]
    %v1519 = vlaneseq
    %v1520 = vshrl.u32 %v1519, 7
    %v1521 = vsub.s32 0, %v1520
    %v1522 = vrot.slane %v1517, %v1521
    %v1523 = vlaneseq
    %v1524 = vshrl.u32 %v1523, 7
    %v1525 = vsub.s32 1, %v1524
    %v1526 = vrot.slane %v1517, %v1525
    %1529 = vmatprep.subr.mxu0 0.0
    %1530 = vmatpush1.msra.mxu0 0.0
    %1531 = vmatprep.subr.mxu0 0.0
    %1532 = vmatpush1.msra.mxu0 0.0
    %1533 = vmatprep.subr.mxu0 0.0
    %1534 = vmatpush1.msra.mxu0 0.0
    %1535 = vmatprep.subr.mxu0 0.0
    %1536 = vmatpush1.msra.mxu0 0.0
    %1537 = vmatprep.subr.mxu0 0.0
    %1538 = vmatpush1.msra.mxu0 0.0
    %1539 = vmatprep.subr.mxu0 0.0
    %1540 = vmatpush1.msra.mxu0 0.0
    %1541 = vmatprep.subr.mxu0 0.0
    %1542 = vmatpush1.msra.mxu0 0.0
    %1543 = vmatprep.subr.mxu0 0.0
    %1544 = vmatpush1.msra.mxu0 0.0
    %1545 = vmatprep.subr.mxu0 0.0
    %1546 = vmatpush1.msra.mxu0 0.0
    %1547 = vmatprep.subr.mxu0 0.0
    %1548 = vmatpush1.msra.mxu0 0.0
    %1549 = vmatprep.subr.mxu0 0.0
    %1550 = vmatpush1.msra.mxu0 0.0
    %1551 = vmatprep.subr.mxu0 0.0
    %1552 = vmatpush1.msra.mxu0 0.0
    %v1553 = vand.u32 %v1516, 4294901760
    %1554 = vmatprep.subr.mxu0 %v1553
    %v1555 = vand.u32 %v1515, 4294901760
    %1556 = vmatpush1.msra.mxu0 %v1555
    %v1557 = vand.u32 %v1514, 4294901760
    %1558 = vmatprep.subr.mxu0 %v1557
    %v1559 = vand.u32 %v1513, 4294901760
    %1560 = vmatpush1.msra.mxu0 %v1559
    %v1561 = vand.u32 %v1512, 4294901760
    %1562 = vmatprep.subr.mxu0 %v1561
    %v1563 = vand.u32 %v1511, 4294901760
    %1564 = vmatpush1.msra.mxu0 %v1563
    %v1565 = vand.u32 %v1510, 4294901760
    %1566 = vmatprep.subr.mxu0 %v1565
    %v1567 = vand.u32 %v1509, 4294901760
    %1568 = vmatpush1.msra.mxu0 %v1567
    %1569 = vmatprep.subr.mxu0 0.0
    %1570 = vmatpush2.msra.mxu0 0.0
    %1571 = vmatprep.subr.mxu0 0.0
    %1572 = vmatpush2.msra.mxu0 0.0
    %1573 = vmatprep.subr.mxu0 0.0
    %1574 = vmatpush2.msra.mxu0 0.0
    %1575 = vmatprep.subr.mxu0 0.0
    %1576 = vmatpush2.msra.mxu0 0.0
    %1577 = vmatprep.subr.mxu0 0.0
    %1578 = vmatpush2.msra.mxu0 0.0
    %1579 = vmatprep.subr.mxu0 0.0
    %1580 = vmatpush2.msra.mxu0 0.0
    %1581 = vmatprep.subr.mxu0 0.0
    %1582 = vmatpush2.msra.mxu0 0.0
    %1583 = vmatprep.subr.mxu0 0.0
    %1584 = vmatpush2.msra.mxu0 0.0
    %1585 = vmatprep.subr.mxu0 0.0
    %1586 = vmatpush2.msra.mxu0 0.0
    %1587 = vmatprep.subr.mxu0 0.0
    %1588 = vmatpush2.msra.mxu0 0.0
    %1589 = vmatprep.subr.mxu0 0.0
    %1590 = vmatpush2.msra.mxu0 0.0
    %1591 = vmatprep.subr.mxu0 0.0
    %1592 = vmatpush2.msra.mxu0 0.0
    %1593 = vmatprep.subr.mxu0 0.0
    %1594 = vmatpush2.msra.mxu0 0.0
    %1595 = vmatprep.subr.mxu0 0.0
    %1596 = vmatpush2.msra.mxu0 0.0
    %1597 = vmatprep.subr.mxu0 0.0
    %1598 = vmatpush2.msra.mxu0 0.0
    %1599 = vmatprep.subr.mxu0 0.0
    %1600 = vmatpush2.msra.mxu0 0.0
    %1601 = vmatprep.mubr.f32.mxu0 0.0
    %v1602 = vand.u32 %v59, 4294901760
    %v1603 = vsub.f32 %v59, %v1602
    %v1604 = vand.u32 %v1603, 4294901760
    %v1605 = vsub.f32 %v1603, %v1604
    %v1606 = vand.u32 %v1605, 4294901760
    %1607 = vmatmul.mubr.f32.gmra.mxu0 %v1606
    %v1608 = vpop.f32.mrf.mxu0
    %v1609 = vadd.f32 %v1522, %v1608
    %v1610 = vpop.f32.mrf.mxu0
    %v1611 = vadd.f32 %v1526, %v1610
    %1612 = vdwg.mxu0
    %1613 = vmatprep.subr.mxu0 0.0
    %1614 = vmatpush1.msra.mxu0 0.0
    %1615 = vmatprep.subr.mxu0 0.0
    %1616 = vmatpush1.msra.mxu0 0.0
    %1617 = vmatprep.subr.mxu0 0.0
    %1618 = vmatpush1.msra.mxu0 0.0
    %1619 = vmatprep.subr.mxu0 0.0
    %1620 = vmatpush1.msra.mxu0 0.0
    %1621 = vmatprep.subr.mxu0 0.0
    %1622 = vmatpush1.msra.mxu0 0.0
    %1623 = vmatprep.subr.mxu0 0.0
    %1624 = vmatpush1.msra.mxu0 0.0
    %1625 = vmatprep.subr.mxu0 0.0
    %1626 = vmatpush1.msra.mxu0 0.0
    %1627 = vmatprep.subr.mxu0 0.0
    %1628 = vmatpush1.msra.mxu0 0.0
    %1629 = vmatprep.subr.mxu0 0.0
    %1630 = vmatpush1.msra.mxu0 0.0
    %1631 = vmatprep.subr.mxu0 0.0
    %1632 = vmatpush1.msra.mxu0 0.0
    %1633 = vmatprep.subr.mxu0 0.0
    %1634 = vmatpush1.msra.mxu0 0.0
    %1635 = vmatprep.subr.mxu0 0.0
    %1636 = vmatpush1.msra.mxu0 0.0
    %v1637 = vand.u32 %v1516, 4294901760
    %v1638 = vsub.f32 %v1516, %v1637
    %v1639 = vand.u32 %v1638, 4294901760
    %v1640 = vsub.f32 %v1638, %v1639
    %v1641 = vand.u32 %v1640, 4294901760
    %1642 = vmatprep.subr.mxu0 %v1641
    %v1643 = vand.u32 %v1515, 4294901760
    %v1644 = vsub.f32 %v1515, %v1643
    %v1645 = vand.u32 %v1644, 4294901760
    %v1646 = vsub.f32 %v1644, %v1645
    %v1647 = vand.u32 %v1646, 4294901760
    %1648 = vmatpush1.msra.mxu0 %v1647
    %v1649 = vand.u32 %v1514, 4294901760
    %v1650 = vsub.f32 %v1514, %v1649
    %v1651 = vand.u32 %v1650, 4294901760
    %v1652 = vsub.f32 %v1650, %v1651
    %v1653 = vand.u32 %v1652, 4294901760
    %1654 = vmatprep.subr.mxu0 %v1653
    %v1655 = vand.u32 %v1513, 4294901760
    %v1656 = vsub.f32 %v1513, %v1655
    %v1657 = vand.u32 %v1656, 4294901760
    %v1658 = vsub.f32 %v1656, %v1657
    %v1659 = vand.u32 %v1658, 4294901760
    %1660 = vmatpush1.msra.mxu0 %v1659
    %v1661 = vand.u32 %v1512, 4294901760
    %v1662 = vsub.f32 %v1512, %v1661
    %v1663 = vand.u32 %v1662, 4294901760
    %v1664 = vsub.f32 %v1662, %v1663
    %v1665 = vand.u32 %v1664, 4294901760
    %1666 = vmatprep.subr.mxu0 %v1665
    %v1667 = vand.u32 %v1511, 4294901760
    %v1668 = vsub.f32 %v1511, %v1667
    %v1669 = vand.u32 %v1668, 4294901760
    %v1670 = vsub.f32 %v1668, %v1669
    %v1671 = vand.u32 %v1670, 4294901760
    %1672 = vmatpush1.msra.mxu0 %v1671
    %v1673 = vand.u32 %v1510, 4294901760
    %v1674 = vsub.f32 %v1510, %v1673
    %v1675 = vand.u32 %v1674, 4294901760
    %v1676 = vsub.f32 %v1674, %v1675
    %v1677 = vand.u32 %v1676, 4294901760
    %1678 = vmatprep.subr.mxu0 %v1677
    %v1679 = vand.u32 %v1509, 4294901760
    %v1680 = vsub.f32 %v1509, %v1679
    %v1681 = vand.u32 %v1680, 4294901760
    %v1682 = vsub.f32 %v1680, %v1681
    %v1683 = vand.u32 %v1682, 4294901760
    %1684 = vmatpush1.msra.mxu0 %v1683
    %1685 = vmatprep.subr.mxu0 0.0
    %1686 = vmatpush2.msra.mxu0 0.0
    %1687 = vmatprep.subr.mxu0 0.0
    %1688 = vmatpush2.msra.mxu0 0.0
    %1689 = vmatprep.subr.mxu0 0.0
    %1690 = vmatpush2.msra.mxu0 0.0
    %1691 = vmatprep.subr.mxu0 0.0
    %1692 = vmatpush2.msra.mxu0 0.0
    %1693 = vmatprep.subr.mxu0 0.0
    %1694 = vmatpush2.msra.mxu0 0.0
    %1695 = vmatprep.subr.mxu0 0.0
    %1696 = vmatpush2.msra.mxu0 0.0
    %1697 = vmatprep.subr.mxu0 0.0
    %1698 = vmatpush2.msra.mxu0 0.0
    %1699 = vmatprep.subr.mxu0 0.0
    %1700 = vmatpush2.msra.mxu0 0.0
    %1701 = vmatprep.subr.mxu0 0.0
    %1702 = vmatpush2.msra.mxu0 0.0
    %1703 = vmatprep.subr.mxu0 0.0
    %1704 = vmatpush2.msra.mxu0 0.0
    %1705 = vmatprep.subr.mxu0 0.0
    %1706 = vmatpush2.msra.mxu0 0.0
    %1707 = vmatprep.subr.mxu0 0.0
    %1708 = vmatpush2.msra.mxu0 0.0
    %1709 = vmatprep.subr.mxu0 0.0
    %1710 = vmatpush2.msra.mxu0 0.0
    %1711 = vmatprep.subr.mxu0 0.0
    %1712 = vmatpush2.msra.mxu0 0.0
    %1713 = vmatprep.subr.mxu0 0.0
    %1714 = vmatpush2.msra.mxu0 0.0
    %1715 = vmatprep.subr.mxu0 0.0
    %1716 = vmatpush2.msra.mxu0 0.0
    %1717 = vmatprep.mubr.f32.mxu0 0.0
    %v1718 = vand.u32 %v59, 4294901760
    %1719 = vmatmul.mubr.f32.gmra.mxu0 %v1718
    %v1720 = vpop.f32.mrf.mxu0
    %v1721 = vadd.f32 %v1609, %v1720
    %v1722 = vpop.f32.mrf.mxu0
    %v1723 = vadd.f32 %v1611, %v1722
    %1724 = vdwg.mxu0
    %1725 = vmatprep.subr.mxu0 0.0
    %1726 = vmatpush1.msra.mxu0 0.0
    %1727 = vmatprep.subr.mxu0 0.0
    %1728 = vmatpush1.msra.mxu0 0.0
    %1729 = vmatprep.subr.mxu0 0.0
    %1730 = vmatpush1.msra.mxu0 0.0
    %1731 = vmatprep.subr.mxu0 0.0
    %1732 = vmatpush1.msra.mxu0 0.0
    %1733 = vmatprep.subr.mxu0 0.0
    %1734 = vmatpush1.msra.mxu0 0.0
    %1735 = vmatprep.subr.mxu0 0.0
    %1736 = vmatpush1.msra.mxu0 0.0
    %1737 = vmatprep.subr.mxu0 0.0
    %1738 = vmatpush1.msra.mxu0 0.0
    %1739 = vmatprep.subr.mxu0 0.0
    %1740 = vmatpush1.msra.mxu0 0.0
    %1741 = vmatprep.subr.mxu0 0.0
    %1742 = vmatpush1.msra.mxu0 0.0
    %1743 = vmatprep.subr.mxu0 0.0
    %1744 = vmatpush1.msra.mxu0 0.0
    %1745 = vmatprep.subr.mxu0 0.0
    %1746 = vmatpush1.msra.mxu0 0.0
    %1747 = vmatprep.subr.mxu0 0.0
    %1748 = vmatpush1.msra.mxu0 0.0
    %v1749 = vand.u32 %v1516, 4294901760
    %v1750 = vsub.f32 %v1516, %v1749
    %1751 = vmatprep.subr.mxu0 %v1750
    %v1752 = vand.u32 %v1515, 4294901760
    %v1753 = vsub.f32 %v1515, %v1752
    %1754 = vmatpush1.msra.mxu0 %v1753
    %v1755 = vand.u32 %v1514, 4294901760
    %v1756 = vsub.f32 %v1514, %v1755
    %1757 = vmatprep.subr.mxu0 %v1756
    %v1758 = vand.u32 %v1513, 4294901760
    %v1759 = vsub.f32 %v1513, %v1758
    %1760 = vmatpush1.msra.mxu0 %v1759
    %v1761 = vand.u32 %v1512, 4294901760
    %v1762 = vsub.f32 %v1512, %v1761
    %1763 = vmatprep.subr.mxu0 %v1762
    %v1764 = vand.u32 %v1511, 4294901760
    %v1765 = vsub.f32 %v1511, %v1764
    %1766 = vmatpush1.msra.mxu0 %v1765
    %v1767 = vand.u32 %v1510, 4294901760
    %v1768 = vsub.f32 %v1510, %v1767
    %1769 = vmatprep.subr.mxu0 %v1768
    %v1770 = vand.u32 %v1509, 4294901760
    %v1771 = vsub.f32 %v1509, %v1770
    %1772 = vmatpush1.msra.mxu0 %v1771
    %1773 = vmatprep.subr.mxu0 0.0
    %1774 = vmatpush2.msra.mxu0 0.0
    %1775 = vmatprep.subr.mxu0 0.0
    %1776 = vmatpush2.msra.mxu0 0.0
    %1777 = vmatprep.subr.mxu0 0.0
    %1778 = vmatpush2.msra.mxu0 0.0
    %1779 = vmatprep.subr.mxu0 0.0
    %1780 = vmatpush2.msra.mxu0 0.0
    %1781 = vmatprep.subr.mxu0 0.0
    %1782 = vmatpush2.msra.mxu0 0.0
    %1783 = vmatprep.subr.mxu0 0.0
    %1784 = vmatpush2.msra.mxu0 0.0
    %1785 = vmatprep.subr.mxu0 0.0
    %1786 = vmatpush2.msra.mxu0 0.0
    %1787 = vmatprep.subr.mxu0 0.0
    %1788 = vmatpush2.msra.mxu0 0.0
    %1789 = vmatprep.subr.mxu0 0.0
    %1790 = vmatpush2.msra.mxu0 0.0
    %1791 = vmatprep.subr.mxu0 0.0
    %1792 = vmatpush2.msra.mxu0 0.0
    %1793 = vmatprep.subr.mxu0 0.0
    %1794 = vmatpush2.msra.mxu0 0.0
    %1795 = vmatprep.subr.mxu0 0.0
    %1796 = vmatpush2.msra.mxu0 0.0
    %1797 = vmatprep.subr.mxu0 0.0
    %1798 = vmatpush2.msra.mxu0 0.0
    %1799 = vmatprep.subr.mxu0 0.0
    %1800 = vmatpush2.msra.mxu0 0.0
    %1801 = vmatprep.subr.mxu0 0.0
    %1802 = vmatpush2.msra.mxu0 0.0
    %1803 = vmatprep.subr.mxu0 0.0
    %1804 = vmatpush2.msra.mxu0 0.0
    %1805 = vmatprep.mubr.f32.mxu0 0.0
    %v1806 = vand.u32 %v59, 4294901760
    %v1807 = vsub.f32 %v59, %v1806
    %1808 = vmatmul.mubr.f32.gmra.mxu0 %v1807
    %v1809 = vpop.f32.mrf.mxu0
    %v1810 = vadd.f32 %v1721, %v1809
    %v1811 = vpop.f32.mrf.mxu0
    %v1812 = vadd.f32 %v1723, %v1811
    %1813 = vdwg.mxu0
    %1814 = vmatprep.subr.mxu0 0.0
    %1815 = vmatpush1.msra.mxu0 0.0
    %1816 = vmatprep.subr.mxu0 0.0
    %1817 = vmatpush1.msra.mxu0 0.0
    %1818 = vmatprep.subr.mxu0 0.0
    %1819 = vmatpush1.msra.mxu0 0.0
    %1820 = vmatprep.subr.mxu0 0.0
    %1821 = vmatpush1.msra.mxu0 0.0
    %1822 = vmatprep.subr.mxu0 0.0
    %1823 = vmatpush1.msra.mxu0 0.0
    %1824 = vmatprep.subr.mxu0 0.0
    %1825 = vmatpush1.msra.mxu0 0.0
    %1826 = vmatprep.subr.mxu0 0.0
    %1827 = vmatpush1.msra.mxu0 0.0
    %1828 = vmatprep.subr.mxu0 0.0
    %1829 = vmatpush1.msra.mxu0 0.0
    %1830 = vmatprep.subr.mxu0 0.0
    %1831 = vmatpush1.msra.mxu0 0.0
    %1832 = vmatprep.subr.mxu0 0.0
    %1833 = vmatpush1.msra.mxu0 0.0
    %1834 = vmatprep.subr.mxu0 0.0
    %1835 = vmatpush1.msra.mxu0 0.0
    %1836 = vmatprep.subr.mxu0 0.0
    %1837 = vmatpush1.msra.mxu0 0.0
    %v1838 = vand.u32 %v1516, 4294901760
    %1839 = vmatprep.subr.mxu0 %v1838
    %v1840 = vand.u32 %v1515, 4294901760
    %1841 = vmatpush1.msra.mxu0 %v1840
    %v1842 = vand.u32 %v1514, 4294901760
    %1843 = vmatprep.subr.mxu0 %v1842
    %v1844 = vand.u32 %v1513, 4294901760
    %1845 = vmatpush1.msra.mxu0 %v1844
    %v1846 = vand.u32 %v1512, 4294901760
    %1847 = vmatprep.subr.mxu0 %v1846
    %v1848 = vand.u32 %v1511, 4294901760
    %1849 = vmatpush1.msra.mxu0 %v1848
    %v1850 = vand.u32 %v1510, 4294901760
    %1851 = vmatprep.subr.mxu0 %v1850
    %v1852 = vand.u32 %v1509, 4294901760
    %1853 = vmatpush1.msra.mxu0 %v1852
    %1854 = vmatprep.subr.mxu0 0.0
    %1855 = vmatpush2.msra.mxu0 0.0
    %1856 = vmatprep.subr.mxu0 0.0
    %1857 = vmatpush2.msra.mxu0 0.0
    %1858 = vmatprep.subr.mxu0 0.0
    %1859 = vmatpush2.msra.mxu0 0.0
    %1860 = vmatprep.subr.mxu0 0.0
    %1861 = vmatpush2.msra.mxu0 0.0
    %1862 = vmatprep.subr.mxu0 0.0
    %1863 = vmatpush2.msra.mxu0 0.0
    %1864 = vmatprep.subr.mxu0 0.0
    %1865 = vmatpush2.msra.mxu0 0.0
    %1866 = vmatprep.subr.mxu0 0.0
    %1867 = vmatpush2.msra.mxu0 0.0
    %1868 = vmatprep.subr.mxu0 0.0
    %1869 = vmatpush2.msra.mxu0 0.0
    %1870 = vmatprep.subr.mxu0 0.0
    %1871 = vmatpush2.msra.mxu0 0.0
    %1872 = vmatprep.subr.mxu0 0.0
    %1873 = vmatpush2.msra.mxu0 0.0
    %1874 = vmatprep.subr.mxu0 0.0
    %1875 = vmatpush2.msra.mxu0 0.0
    %1876 = vmatprep.subr.mxu0 0.0
    %1877 = vmatpush2.msra.mxu0 0.0
    %1878 = vmatprep.subr.mxu0 0.0
    %1879 = vmatpush2.msra.mxu0 0.0
    %1880 = vmatprep.subr.mxu0 0.0
    %1881 = vmatpush2.msra.mxu0 0.0
    %1882 = vmatprep.subr.mxu0 0.0
    %1883 = vmatpush2.msra.mxu0 0.0
    %1884 = vmatprep.subr.mxu0 0.0
    %1885 = vmatpush2.msra.mxu0 0.0
    %1886 = vmatprep.mubr.f32.mxu0 0.0
    %v1887 = vand.u32 %v59, 4294901760
    %v1888 = vsub.f32 %v59, %v1887
    %v1889 = vand.u32 %v1888, 4294901760
    %1890 = vmatmul.mubr.f32.gmra.mxu0 %v1889
    %v1891 = vpop.f32.mrf.mxu0
    %v1892 = vadd.f32 %v1810, %v1891
    %v1893 = vpop.f32.mrf.mxu0
    %v1894 = vadd.f32 %v1812, %v1893
    %1895 = vdwg.mxu0
    %1896 = vmatprep.subr.mxu0 0.0
    %1897 = vmatpush1.msra.mxu0 0.0
    %1898 = vmatprep.subr.mxu0 0.0
    %1899 = vmatpush1.msra.mxu0 0.0
    %1900 = vmatprep.subr.mxu0 0.0
    %1901 = vmatpush1.msra.mxu0 0.0
    %1902 = vmatprep.subr.mxu0 0.0
    %1903 = vmatpush1.msra.mxu0 0.0
    %1904 = vmatprep.subr.mxu0 0.0
    %1905 = vmatpush1.msra.mxu0 0.0
    %1906 = vmatprep.subr.mxu0 0.0
    %1907 = vmatpush1.msra.mxu0 0.0
    %1908 = vmatprep.subr.mxu0 0.0
    %1909 = vmatpush1.msra.mxu0 0.0
    %1910 = vmatprep.subr.mxu0 0.0
    %1911 = vmatpush1.msra.mxu0 0.0
    %1912 = vmatprep.subr.mxu0 0.0
    %1913 = vmatpush1.msra.mxu0 0.0
    %1914 = vmatprep.subr.mxu0 0.0
    %1915 = vmatpush1.msra.mxu0 0.0
    %1916 = vmatprep.subr.mxu0 0.0
    %1917 = vmatpush1.msra.mxu0 0.0
    %1918 = vmatprep.subr.mxu0 0.0
    %1919 = vmatpush1.msra.mxu0 0.0
    %v1920 = vand.u32 %v1516, 4294901760
    %v1921 = vsub.f32 %v1516, %v1920
    %v1922 = vand.u32 %v1921, 4294901760
    %1923 = vmatprep.subr.mxu0 %v1922
    %v1924 = vand.u32 %v1515, 4294901760
    %v1925 = vsub.f32 %v1515, %v1924
    %v1926 = vand.u32 %v1925, 4294901760
    %1927 = vmatpush1.msra.mxu0 %v1926
    %v1928 = vand.u32 %v1514, 4294901760
    %v1929 = vsub.f32 %v1514, %v1928
    %v1930 = vand.u32 %v1929, 4294901760
    %1931 = vmatprep.subr.mxu0 %v1930
    %v1932 = vand.u32 %v1513, 4294901760
    %v1933 = vsub.f32 %v1513, %v1932
    %v1934 = vand.u32 %v1933, 4294901760
    %1935 = vmatpush1.msra.mxu0 %v1934
    %v1936 = vand.u32 %v1512, 4294901760
    %v1937 = vsub.f32 %v1512, %v1936
    %v1938 = vand.u32 %v1937, 4294901760
    %1939 = vmatprep.subr.mxu0 %v1938
    %v1940 = vand.u32 %v1511, 4294901760
    %v1941 = vsub.f32 %v1511, %v1940
    %v1942 = vand.u32 %v1941, 4294901760
    %1943 = vmatpush1.msra.mxu0 %v1942
    %v1944 = vand.u32 %v1510, 4294901760
    %v1945 = vsub.f32 %v1510, %v1944
    %v1946 = vand.u32 %v1945, 4294901760
    %1947 = vmatprep.subr.mxu0 %v1946
    %v1948 = vand.u32 %v1509, 4294901760
    %v1949 = vsub.f32 %v1509, %v1948
    %v1950 = vand.u32 %v1949, 4294901760
    %1951 = vmatpush1.msra.mxu0 %v1950
    %1952 = vmatprep.subr.mxu0 0.0
    %1953 = vmatpush2.msra.mxu0 0.0
    %1954 = vmatprep.subr.mxu0 0.0
    %1955 = vmatpush2.msra.mxu0 0.0
    %1956 = vmatprep.subr.mxu0 0.0
    %1957 = vmatpush2.msra.mxu0 0.0
    %1958 = vmatprep.subr.mxu0 0.0
    %1959 = vmatpush2.msra.mxu0 0.0
    %1960 = vmatprep.subr.mxu0 0.0
    %1961 = vmatpush2.msra.mxu0 0.0
    %1962 = vmatprep.subr.mxu0 0.0
    %1963 = vmatpush2.msra.mxu0 0.0
    %1964 = vmatprep.subr.mxu0 0.0
    %1965 = vmatpush2.msra.mxu0 0.0
    %1966 = vmatprep.subr.mxu0 0.0
    %1967 = vmatpush2.msra.mxu0 0.0
    %1968 = vmatprep.subr.mxu0 0.0
    %1969 = vmatpush2.msra.mxu0 0.0
    %1970 = vmatprep.subr.mxu0 0.0
    %1971 = vmatpush2.msra.mxu0 0.0
    %1972 = vmatprep.subr.mxu0 0.0
    %1973 = vmatpush2.msra.mxu0 0.0
    %1974 = vmatprep.subr.mxu0 0.0
    %1975 = vmatpush2.msra.mxu0 0.0
    %1976 = vmatprep.subr.mxu0 0.0
    %1977 = vmatpush2.msra.mxu0 0.0
    %1978 = vmatprep.subr.mxu0 0.0
    %1979 = vmatpush2.msra.mxu0 0.0
    %1980 = vmatprep.subr.mxu0 0.0
    %1981 = vmatpush2.msra.mxu0 0.0
    %1982 = vmatprep.subr.mxu0 0.0
    %1983 = vmatpush2.msra.mxu0 0.0
    %1984 = vmatprep.mubr.f32.mxu0 0.0
    %v1985 = vand.u32 %v59, 4294901760
    %1986 = vmatmul.mubr.f32.gmra.mxu0 %v1985
    %v1987 = vpop.f32.mrf.mxu0
    %v1988 = vadd.f32 %v1892, %v1987
    %v1989 = vpop.f32.mrf.mxu0
    %v1990 = vadd.f32 %v1894, %v1989
    %1991 = vdwg.mxu0
    %1992 = vmatprep.subr.mxu0 0.0
    %1993 = vmatpush1.msra.mxu0 0.0
    %1994 = vmatprep.subr.mxu0 0.0
    %1995 = vmatpush1.msra.mxu0 0.0
    %1996 = vmatprep.subr.mxu0 0.0
    %1997 = vmatpush1.msra.mxu0 0.0
    %1998 = vmatprep.subr.mxu0 0.0
    %1999 = vmatpush1.msra.mxu0 0.0
    %2000 = vmatprep.subr.mxu0 0.0
    %2001 = vmatpush1.msra.mxu0 0.0
    %2002 = vmatprep.subr.mxu0 0.0
    %2003 = vmatpush1.msra.mxu0 0.0
    %2004 = vmatprep.subr.mxu0 0.0
    %2005 = vmatpush1.msra.mxu0 0.0
    %2006 = vmatprep.subr.mxu0 0.0
    %2007 = vmatpush1.msra.mxu0 0.0
    %2008 = vmatprep.subr.mxu0 0.0
    %2009 = vmatpush1.msra.mxu0 0.0
    %2010 = vmatprep.subr.mxu0 0.0
    %2011 = vmatpush1.msra.mxu0 0.0
    %2012 = vmatprep.subr.mxu0 0.0
    %2013 = vmatpush1.msra.mxu0 0.0
    %2014 = vmatprep.subr.mxu0 0.0
    %2015 = vmatpush1.msra.mxu0 0.0
    %v2016 = vand.u32 %v1516, 4294901760
    %2017 = vmatprep.subr.mxu0 %v2016
    %v2018 = vand.u32 %v1515, 4294901760
    %2019 = vmatpush1.msra.mxu0 %v2018
    %v2020 = vand.u32 %v1514, 4294901760
    %2021 = vmatprep.subr.mxu0 %v2020
    %v2022 = vand.u32 %v1513, 4294901760
    %2023 = vmatpush1.msra.mxu0 %v2022
    %v2024 = vand.u32 %v1512, 4294901760
    %2025 = vmatprep.subr.mxu0 %v2024
    %v2026 = vand.u32 %v1511, 4294901760
    %2027 = vmatpush1.msra.mxu0 %v2026
    %v2028 = vand.u32 %v1510, 4294901760
    %2029 = vmatprep.subr.mxu0 %v2028
    %v2030 = vand.u32 %v1509, 4294901760
    %2031 = vmatpush1.msra.mxu0 %v2030
    %2032 = vmatprep.subr.mxu0 0.0
    %2033 = vmatpush2.msra.mxu0 0.0
    %2034 = vmatprep.subr.mxu0 0.0
    %2035 = vmatpush2.msra.mxu0 0.0
    %2036 = vmatprep.subr.mxu0 0.0
    %2037 = vmatpush2.msra.mxu0 0.0
    %2038 = vmatprep.subr.mxu0 0.0
    %2039 = vmatpush2.msra.mxu0 0.0
    %2040 = vmatprep.subr.mxu0 0.0
    %2041 = vmatpush2.msra.mxu0 0.0
    %2042 = vmatprep.subr.mxu0 0.0
    %2043 = vmatpush2.msra.mxu0 0.0
    %2044 = vmatprep.subr.mxu0 0.0
    %2045 = vmatpush2.msra.mxu0 0.0
    %2046 = vmatprep.subr.mxu0 0.0
    %2047 = vmatpush2.msra.mxu0 0.0
    %2048 = vmatprep.subr.mxu0 0.0
    %2049 = vmatpush2.msra.mxu0 0.0
    %2050 = vmatprep.subr.mxu0 0.0
    %2051 = vmatpush2.msra.mxu0 0.0
    %2052 = vmatprep.subr.mxu0 0.0
    %2053 = vmatpush2.msra.mxu0 0.0
    %2054 = vmatprep.subr.mxu0 0.0
    %2055 = vmatpush2.msra.mxu0 0.0
    %2056 = vmatprep.subr.mxu0 0.0
    %2057 = vmatpush2.msra.mxu0 0.0
    %2058 = vmatprep.subr.mxu0 0.0
    %2059 = vmatpush2.msra.mxu0 0.0
    %2060 = vmatprep.subr.mxu0 0.0
    %2061 = vmatpush2.msra.mxu0 0.0
    %2062 = vmatprep.subr.mxu0 0.0
    %2063 = vmatpush2.msra.mxu0 0.0
    %2064 = vmatprep.mubr.f32.mxu0 0.0
    %v2065 = vand.u32 %v59, 4294901760
    %2066 = vmatmul.mubr.f32.gmra.mxu0 %v2065
    %v2067 = vpop.f32.mrf.mxu0
    %v2068 = vadd.f32 %v1988, %v2067
    %v2069 = vpop.f32.mrf.mxu0
    %v2070 = vadd.f32 %v1990, %v2069
    %2071 = vdwg.mxu0
    %v2072 = vmax.f32 %v2068, 0.0
    %v2073 = vmax.f32 %v2070, 0.0
    %v2074 = vld [vmem:[%s7] sm:$0xff]
    %v2075 = vld [vmem:[%s7 + $0x8] sm:$0xff]
    %v2076 = vld [vmem:[%s7 + $0x10] sm:$0xff]
    %v2077 = vld [vmem:[%s7 + $0x18] sm:$0xff]
    %v2078 = vld [vmem:[%s7 + $0x20] sm:$0xff]
    %v2079 = vld [vmem:[%s7 + $0x28] sm:$0xff]
    %v2080 = vld [vmem:[%s7 + $0x30] sm:$0xff]
    %v2081 = vld [vmem:[%s7 + $0x38] sm:$0xff]
    %v2082 = vld [vmem:[%s7 + $0x40] sm:$0xff]
    %v2083 = vld [vmem:[%s7 + $0x48] sm:$0xff]
    %v2084 = vld [vmem:[%s7 + $0x50] sm:$0xff]
    %v2085 = vld [vmem:[%s7 + $0x58] sm:$0xff]
    %v2086 = vld [vmem:[%s7 + $0x60] sm:$0xff]
    %v2087 = vld [vmem:[%s7 + $0x68] sm:$0xff]
    %v2088 = vld [vmem:[%s7 + $0x70] sm:$0xff]
    %v2089 = vld [vmem:[%s7 + $0x78] sm:$0xff]
    %v2090 = vld [vmem:[%s7 + $0x80] sm:$0xff]
    %v2091 = vld [vmem:[%s7 + $0x88] sm:$0xff]
    %v2092 = vld [vmem:[%s7 + $0x90] sm:$0xff]
    %v2093 = vld [vmem:[%s7 + $0x98] sm:$0xff]
    %v2094 = vld [vmem:[%s7 + $0xa0] sm:$0xff]
    %v2095 = vld [vmem:[%s7 + $0xa8] sm:$0xff]
    %v2096 = vld [vmem:[%s7 + $0xb0] sm:$0xff]
    %v2097 = vld [vmem:[%s7 + $0xb8] sm:$0xff]
    %v2098 = vld [vmem:[%s7 + $0xc0] sm:$0xff]
    %v2099 = vld [vmem:[%s7 + $0xc8] sm:$0xff]
    %v2100 = vld [vmem:[%s7 + $0xd0] sm:$0xff]
    %v2101 = vld [vmem:[%s7 + $0xd8] sm:$0xff]
    %v2102 = vld [vmem:[%s7 + $0xe0] sm:$0xff]
    %v2103 = vld [vmem:[%s7 + $0xe8] sm:$0xff]
    %v2104 = vld [vmem:[%s7 + $0xf0] sm:$0xff]
    %v2105 = vld [vmem:[%s7 + $0xf8] sm:$0xff]
    %v2106 = vld [vmem:[%s8] sm:$0x1]
    %v2108 = vlaneseq
    %v2109 = vshrl.u32 %v2108, 7
    %v2110 = vsub.s32 0, %v2109
    %v2111 = vrot.slane %v2106, %v2110
    %2113 = vmatprep.subr.mxu0 0.0
    %v2114 = vand.u32 %v2089, 4294901760
    %2115 = vmatpush1.msra.mxu0 %v2114
    %2116 = vmatprep.subr.mxu0 0.0
    %v2117 = vand.u32 %v2088, 4294901760
    %2118 = vmatpush1.msra.mxu0 %v2117
    %2119 = vmatprep.subr.mxu0 0.0
    %v2120 = vand.u32 %v2087, 4294901760
    %2121 = vmatpush1.msra.mxu0 %v2120
    %2122 = vmatprep.subr.mxu0 0.0
    %v2123 = vand.u32 %v2086, 4294901760
    %2124 = vmatpush1.msra.mxu0 %v2123
    %2125 = vmatprep.subr.mxu0 0.0
    %v2126 = vand.u32 %v2085, 4294901760
    %2127 = vmatpush1.msra.mxu0 %v2126
    %2128 = vmatprep.subr.mxu0 0.0
    %v2129 = vand.u32 %v2084, 4294901760
    %2130 = vmatpush1.msra.mxu0 %v2129
    %2131 = vmatprep.subr.mxu0 0.0
    %v2132 = vand.u32 %v2083, 4294901760
    %2133 = vmatpush1.msra.mxu0 %v2132
    %2134 = vmatprep.subr.mxu0 0.0
    %v2135 = vand.u32 %v2082, 4294901760
    %2136 = vmatpush1.msra.mxu0 %v2135
    %2137 = vmatprep.subr.mxu0 0.0
    %v2138 = vand.u32 %v2081, 4294901760
    %2139 = vmatpush1.msra.mxu0 %v2138
    %2140 = vmatprep.subr.mxu0 0.0
    %v2141 = vand.u32 %v2080, 4294901760
    %2142 = vmatpush1.msra.mxu0 %v2141
    %2143 = vmatprep.subr.mxu0 0.0
    %v2144 = vand.u32 %v2079, 4294901760
    %2145 = vmatpush1.msra.mxu0 %v2144
    %2146 = vmatprep.subr.mxu0 0.0
    %v2147 = vand.u32 %v2078, 4294901760
    %2148 = vmatpush1.msra.mxu0 %v2147
    %2149 = vmatprep.subr.mxu0 0.0
    %v2150 = vand.u32 %v2077, 4294901760
    %2151 = vmatpush1.msra.mxu0 %v2150
    %2152 = vmatprep.subr.mxu0 0.0
    %v2153 = vand.u32 %v2076, 4294901760
    %2154 = vmatpush1.msra.mxu0 %v2153
    %2155 = vmatprep.subr.mxu0 0.0
    %v2156 = vand.u32 %v2075, 4294901760
    %2157 = vmatpush1.msra.mxu0 %v2156
    %2158 = vmatprep.subr.mxu0 0.0
    %v2159 = vand.u32 %v2074, 4294901760
    %2160 = vmatpush1.msra.mxu0 %v2159
    %2161 = vmatprep.subr.mxu0 0.0
    %v2162 = vand.u32 %v2105, 4294901760
    %2163 = vmatpush2.msra.mxu0 %v2162
    %2164 = vmatprep.subr.mxu0 0.0
    %v2165 = vand.u32 %v2104, 4294901760
    %2166 = vmatpush2.msra.mxu0 %v2165
    %2167 = vmatprep.subr.mxu0 0.0
    %v2168 = vand.u32 %v2103, 4294901760
    %2169 = vmatpush2.msra.mxu0 %v2168
    %2170 = vmatprep.subr.mxu0 0.0
    %v2171 = vand.u32 %v2102, 4294901760
    %2172 = vmatpush2.msra.mxu0 %v2171
    %2173 = vmatprep.subr.mxu0 0.0
    %v2174 = vand.u32 %v2101, 4294901760
    %2175 = vmatpush2.msra.mxu0 %v2174
    %2176 = vmatprep.subr.mxu0 0.0
    %v2177 = vand.u32 %v2100, 4294901760
    %2178 = vmatpush2.msra.mxu0 %v2177
    %2179 = vmatprep.subr.mxu0 0.0
    %v2180 = vand.u32 %v2099, 4294901760
    %2181 = vmatpush2.msra.mxu0 %v2180
    %2182 = vmatprep.subr.mxu0 0.0
    %v2183 = vand.u32 %v2098, 4294901760
    %2184 = vmatpush2.msra.mxu0 %v2183
    %2185 = vmatprep.subr.mxu0 0.0
    %v2186 = vand.u32 %v2097, 4294901760
    %2187 = vmatpush2.msra.mxu0 %v2186
    %2188 = vmatprep.subr.mxu0 0.0
    %v2189 = vand.u32 %v2096, 4294901760
    %2190 = vmatpush2.msra.mxu0 %v2189
    %2191 = vmatprep.subr.mxu0 0.0
    %v2192 = vand.u32 %v2095, 4294901760
    %2193 = vmatpush2.msra.mxu0 %v2192
    %2194 = vmatprep.subr.mxu0 0.0
    %v2195 = vand.u32 %v2094, 4294901760
    %2196 = vmatpush2.msra.mxu0 %v2195
    %2197 = vmatprep.subr.mxu0 0.0
    %v2198 = vand.u32 %v2093, 4294901760
    %2199 = vmatpush2.msra.mxu0 %v2198
    %2200 = vmatprep.subr.mxu0 0.0
    %v2201 = vand.u32 %v2092, 4294901760
    %2202 = vmatpush2.msra.mxu0 %v2201
    %2203 = vmatprep.subr.mxu0 0.0
    %v2204 = vand.u32 %v2091, 4294901760
    %2205 = vmatpush2.msra.mxu0 %v2204
    %2206 = vmatprep.subr.mxu0 0.0
    %v2207 = vand.u32 %v2090, 4294901760
    %2208 = vmatpush2.msra.mxu0 %v2207
    %v2209 = vand.u32 %v2073, 4294901760
    %v2210 = vsub.f32 %v2073, %v2209
    %v2211 = vand.u32 %v2210, 4294901760
    %v2212 = vsub.f32 %v2210, %v2211
    %v2213 = vand.u32 %v2212, 4294901760
    %2214 = vmatprep.mubr.f32.mxu0 %v2213
    %v2215 = vand.u32 %v2072, 4294901760
    %v2216 = vsub.f32 %v2072, %v2215
    %v2217 = vand.u32 %v2216, 4294901760
    %v2218 = vsub.f32 %v2216, %v2217
    %v2219 = vand.u32 %v2218, 4294901760
    %2220 = vmatmul.mubr.f32.gmra.mxu0 %v2219
    %v2221 = vpop.f32.mrf.mxu0
    %v2222 = vadd.f32 %v2111, %v2221
    %v2223 = vpop.f32.mrf.mxu0
    %2224 = vdwg.mxu0
    %2225 = vmatprep.subr.mxu0 0.0
    %v2226 = vand.u32 %v2089, 4294901760
    %v2227 = vsub.f32 %v2089, %v2226
    %v2228 = vand.u32 %v2227, 4294901760
    %v2229 = vsub.f32 %v2227, %v2228
    %v2230 = vand.u32 %v2229, 4294901760
    %2231 = vmatpush1.msra.mxu0 %v2230
    %2232 = vmatprep.subr.mxu0 0.0
    %v2233 = vand.u32 %v2088, 4294901760
    %v2234 = vsub.f32 %v2088, %v2233
    %v2235 = vand.u32 %v2234, 4294901760
    %v2236 = vsub.f32 %v2234, %v2235
    %v2237 = vand.u32 %v2236, 4294901760
    %2238 = vmatpush1.msra.mxu0 %v2237
    %2239 = vmatprep.subr.mxu0 0.0
    %v2240 = vand.u32 %v2087, 4294901760
    %v2241 = vsub.f32 %v2087, %v2240
    %v2242 = vand.u32 %v2241, 4294901760
    %v2243 = vsub.f32 %v2241, %v2242
    %v2244 = vand.u32 %v2243, 4294901760
    %2245 = vmatpush1.msra.mxu0 %v2244
    %2246 = vmatprep.subr.mxu0 0.0
    %v2247 = vand.u32 %v2086, 4294901760
    %v2248 = vsub.f32 %v2086, %v2247
    %v2249 = vand.u32 %v2248, 4294901760
    %v2250 = vsub.f32 %v2248, %v2249
    %v2251 = vand.u32 %v2250, 4294901760
    %2252 = vmatpush1.msra.mxu0 %v2251
    %2253 = vmatprep.subr.mxu0 0.0
    %v2254 = vand.u32 %v2085, 4294901760
    %v2255 = vsub.f32 %v2085, %v2254
    %v2256 = vand.u32 %v2255, 4294901760
    %v2257 = vsub.f32 %v2255, %v2256
    %v2258 = vand.u32 %v2257, 4294901760
    %2259 = vmatpush1.msra.mxu0 %v2258
    %2260 = vmatprep.subr.mxu0 0.0
    %v2261 = vand.u32 %v2084, 4294901760
    %v2262 = vsub.f32 %v2084, %v2261
    %v2263 = vand.u32 %v2262, 4294901760
    %v2264 = vsub.f32 %v2262, %v2263
    %v2265 = vand.u32 %v2264, 4294901760
    %2266 = vmatpush1.msra.mxu0 %v2265
    %2267 = vmatprep.subr.mxu0 0.0
    %v2268 = vand.u32 %v2083, 4294901760
    %v2269 = vsub.f32 %v2083, %v2268
    %v2270 = vand.u32 %v2269, 4294901760
    %v2271 = vsub.f32 %v2269, %v2270
    %v2272 = vand.u32 %v2271, 4294901760
    %2273 = vmatpush1.msra.mxu0 %v2272
    %2274 = vmatprep.subr.mxu0 0.0
    %v2275 = vand.u32 %v2082, 4294901760
    %v2276 = vsub.f32 %v2082, %v2275
    %v2277 = vand.u32 %v2276, 4294901760
    %v2278 = vsub.f32 %v2276, %v2277
    %v2279 = vand.u32 %v2278, 4294901760
    %2280 = vmatpush1.msra.mxu0 %v2279
    %2281 = vmatprep.subr.mxu0 0.0
    %v2282 = vand.u32 %v2081, 4294901760
    %v2283 = vsub.f32 %v2081, %v2282
    %v2284 = vand.u32 %v2283, 4294901760
    %v2285 = vsub.f32 %v2283, %v2284
    %v2286 = vand.u32 %v2285, 4294901760
    %2287 = vmatpush1.msra.mxu0 %v2286
    %2288 = vmatprep.subr.mxu0 0.0
    %v2289 = vand.u32 %v2080, 4294901760
    %v2290 = vsub.f32 %v2080, %v2289
    %v2291 = vand.u32 %v2290, 4294901760
    %v2292 = vsub.f32 %v2290, %v2291
    %v2293 = vand.u32 %v2292, 4294901760
    %2294 = vmatpush1.msra.mxu0 %v2293
    %2295 = vmatprep.subr.mxu0 0.0
    %v2296 = vand.u32 %v2079, 4294901760
    %v2297 = vsub.f32 %v2079, %v2296
    %v2298 = vand.u32 %v2297, 4294901760
    %v2299 = vsub.f32 %v2297, %v2298
    %v2300 = vand.u32 %v2299, 4294901760
    %2301 = vmatpush1.msra.mxu0 %v2300
    %2302 = vmatprep.subr.mxu0 0.0
    %v2303 = vand.u32 %v2078, 4294901760
    %v2304 = vsub.f32 %v2078, %v2303
    %v2305 = vand.u32 %v2304, 4294901760
    %v2306 = vsub.f32 %v2304, %v2305
    %v2307 = vand.u32 %v2306, 4294901760
    %2308 = vmatpush1.msra.mxu0 %v2307
    %2309 = vmatprep.subr.mxu0 0.0
    %v2310 = vand.u32 %v2077, 4294901760
    %v2311 = vsub.f32 %v2077, %v2310
    %v2312 = vand.u32 %v2311, 4294901760
    %v2313 = vsub.f32 %v2311, %v2312
    %v2314 = vand.u32 %v2313, 4294901760
    %2315 = vmatpush1.msra.mxu0 %v2314
    %2316 = vmatprep.subr.mxu0 0.0
    %v2317 = vand.u32 %v2076, 4294901760
    %v2318 = vsub.f32 %v2076, %v2317
    %v2319 = vand.u32 %v2318, 4294901760
    %v2320 = vsub.f32 %v2318, %v2319
    %v2321 = vand.u32 %v2320, 4294901760
    %2322 = vmatpush1.msra.mxu0 %v2321
    %2323 = vmatprep.subr.mxu0 0.0
    %v2324 = vand.u32 %v2075, 4294901760
    %v2325 = vsub.f32 %v2075, %v2324
    %v2326 = vand.u32 %v2325, 4294901760
    %v2327 = vsub.f32 %v2325, %v2326
    %v2328 = vand.u32 %v2327, 4294901760
    %2329 = vmatpush1.msra.mxu0 %v2328
    %2330 = vmatprep.subr.mxu0 0.0
    %v2331 = vand.u32 %v2074, 4294901760
    %v2332 = vsub.f32 %v2074, %v2331
    %v2333 = vand.u32 %v2332, 4294901760
    %v2334 = vsub.f32 %v2332, %v2333
    %v2335 = vand.u32 %v2334, 4294901760
    %2336 = vmatpush1.msra.mxu0 %v2335
    %2337 = vmatprep.subr.mxu0 0.0
    %v2338 = vand.u32 %v2105, 4294901760
    %v2339 = vsub.f32 %v2105, %v2338
    %v2340 = vand.u32 %v2339, 4294901760
    %v2341 = vsub.f32 %v2339, %v2340
    %v2342 = vand.u32 %v2341, 4294901760
    %2343 = vmatpush2.msra.mxu0 %v2342
    %2344 = vmatprep.subr.mxu0 0.0
    %v2345 = vand.u32 %v2104, 4294901760
    %v2346 = vsub.f32 %v2104, %v2345
    %v2347 = vand.u32 %v2346, 4294901760
    %v2348 = vsub.f32 %v2346, %v2347
    %v2349 = vand.u32 %v2348, 4294901760
    %2350 = vmatpush2.msra.mxu0 %v2349
    %2351 = vmatprep.subr.mxu0 0.0
    %v2352 = vand.u32 %v2103, 4294901760
    %v2353 = vsub.f32 %v2103, %v2352
    %v2354 = vand.u32 %v2353, 4294901760
    %v2355 = vsub.f32 %v2353, %v2354
    %v2356 = vand.u32 %v2355, 4294901760
    %2357 = vmatpush2.msra.mxu0 %v2356
    %2358 = vmatprep.subr.mxu0 0.0
    %v2359 = vand.u32 %v2102, 4294901760
    %v2360 = vsub.f32 %v2102, %v2359
    %v2361 = vand.u32 %v2360, 4294901760
    %v2362 = vsub.f32 %v2360, %v2361
    %v2363 = vand.u32 %v2362, 4294901760
    %2364 = vmatpush2.msra.mxu0 %v2363
    %2365 = vmatprep.subr.mxu0 0.0
    %v2366 = vand.u32 %v2101, 4294901760
    %v2367 = vsub.f32 %v2101, %v2366
    %v2368 = vand.u32 %v2367, 4294901760
    %v2369 = vsub.f32 %v2367, %v2368
    %v2370 = vand.u32 %v2369, 4294901760
    %2371 = vmatpush2.msra.mxu0 %v2370
    %2372 = vmatprep.subr.mxu0 0.0
    %v2373 = vand.u32 %v2100, 4294901760
    %v2374 = vsub.f32 %v2100, %v2373
    %v2375 = vand.u32 %v2374, 4294901760
    %v2376 = vsub.f32 %v2374, %v2375
    %v2377 = vand.u32 %v2376, 4294901760
    %2378 = vmatpush2.msra.mxu0 %v2377
    %2379 = vmatprep.subr.mxu0 0.0
    %v2380 = vand.u32 %v2099, 4294901760
    %v2381 = vsub.f32 %v2099, %v2380
    %v2382 = vand.u32 %v2381, 4294901760
    %v2383 = vsub.f32 %v2381, %v2382
    %v2384 = vand.u32 %v2383, 4294901760
    %2385 = vmatpush2.msra.mxu0 %v2384
    %2386 = vmatprep.subr.mxu0 0.0
    %v2387 = vand.u32 %v2098, 4294901760
    %v2388 = vsub.f32 %v2098, %v2387
    %v2389 = vand.u32 %v2388, 4294901760
    %v2390 = vsub.f32 %v2388, %v2389
    %v2391 = vand.u32 %v2390, 4294901760
    %2392 = vmatpush2.msra.mxu0 %v2391
    %2393 = vmatprep.subr.mxu0 0.0
    %v2394 = vand.u32 %v2097, 4294901760
    %v2395 = vsub.f32 %v2097, %v2394
    %v2396 = vand.u32 %v2395, 4294901760
    %v2397 = vsub.f32 %v2395, %v2396
    %v2398 = vand.u32 %v2397, 4294901760
    %2399 = vmatpush2.msra.mxu0 %v2398
    %2400 = vmatprep.subr.mxu0 0.0
    %v2401 = vand.u32 %v2096, 4294901760
    %v2402 = vsub.f32 %v2096, %v2401
    %v2403 = vand.u32 %v2402, 4294901760
    %v2404 = vsub.f32 %v2402, %v2403
    %v2405 = vand.u32 %v2404, 4294901760
    %2406 = vmatpush2.msra.mxu0 %v2405
    %2407 = vmatprep.subr.mxu0 0.0
    %v2408 = vand.u32 %v2095, 4294901760
    %v2409 = vsub.f32 %v2095, %v2408
    %v2410 = vand.u32 %v2409, 4294901760
    %v2411 = vsub.f32 %v2409, %v2410
    %v2412 = vand.u32 %v2411, 4294901760
    %2413 = vmatpush2.msra.mxu0 %v2412
    %2414 = vmatprep.subr.mxu0 0.0
    %v2415 = vand.u32 %v2094, 4294901760
    %v2416 = vsub.f32 %v2094, %v2415
    %v2417 = vand.u32 %v2416, 4294901760
    %v2418 = vsub.f32 %v2416, %v2417
    %v2419 = vand.u32 %v2418, 4294901760
    %2420 = vmatpush2.msra.mxu0 %v2419
    %2421 = vmatprep.subr.mxu0 0.0
    %v2422 = vand.u32 %v2093, 4294901760
    %v2423 = vsub.f32 %v2093, %v2422
    %v2424 = vand.u32 %v2423, 4294901760
    %v2425 = vsub.f32 %v2423, %v2424
    %v2426 = vand.u32 %v2425, 4294901760
    %2427 = vmatpush2.msra.mxu0 %v2426
    %2428 = vmatprep.subr.mxu0 0.0
    %v2429 = vand.u32 %v2092, 4294901760
    %v2430 = vsub.f32 %v2092, %v2429
    %v2431 = vand.u32 %v2430, 4294901760
    %v2432 = vsub.f32 %v2430, %v2431
    %v2433 = vand.u32 %v2432, 4294901760
    %2434 = vmatpush2.msra.mxu0 %v2433
    %2435 = vmatprep.subr.mxu0 0.0
    %v2436 = vand.u32 %v2091, 4294901760
    %v2437 = vsub.f32 %v2091, %v2436
    %v2438 = vand.u32 %v2437, 4294901760
    %v2439 = vsub.f32 %v2437, %v2438
    %v2440 = vand.u32 %v2439, 4294901760
    %2441 = vmatpush2.msra.mxu0 %v2440
    %2442 = vmatprep.subr.mxu0 0.0
    %v2443 = vand.u32 %v2090, 4294901760
    %v2444 = vsub.f32 %v2090, %v2443
    %v2445 = vand.u32 %v2444, 4294901760
    %v2446 = vsub.f32 %v2444, %v2445
    %v2447 = vand.u32 %v2446, 4294901760
    %2448 = vmatpush2.msra.mxu0 %v2447
    %v2449 = vand.u32 %v2073, 4294901760
    %2450 = vmatprep.mubr.f32.mxu0 %v2449
    %v2451 = vand.u32 %v2072, 4294901760
    %2452 = vmatmul.mubr.f32.gmra.mxu0 %v2451
    %v2453 = vpop.f32.mrf.mxu0
    %v2454 = vadd.f32 %v2222, %v2453
    %v2455 = vpop.f32.mrf.mxu0
    %2456 = vdwg.mxu0
    %2457 = vmatprep.subr.mxu0 0.0
    %v2458 = vand.u32 %v2089, 4294901760
    %v2459 = vsub.f32 %v2089, %v2458
    %2460 = vmatpush1.msra.mxu0 %v2459
    %2461 = vmatprep.subr.mxu0 0.0
    %v2462 = vand.u32 %v2088, 4294901760
    %v2463 = vsub.f32 %v2088, %v2462
    %2464 = vmatpush1.msra.mxu0 %v2463
    %2465 = vmatprep.subr.mxu0 0.0
    %v2466 = vand.u32 %v2087, 4294901760
    %v2467 = vsub.f32 %v2087, %v2466
    %2468 = vmatpush1.msra.mxu0 %v2467
    %2469 = vmatprep.subr.mxu0 0.0
    %v2470 = vand.u32 %v2086, 4294901760
    %v2471 = vsub.f32 %v2086, %v2470
    %2472 = vmatpush1.msra.mxu0 %v2471
    %2473 = vmatprep.subr.mxu0 0.0
    %v2474 = vand.u32 %v2085, 4294901760
    %v2475 = vsub.f32 %v2085, %v2474
    %2476 = vmatpush1.msra.mxu0 %v2475
    %2477 = vmatprep.subr.mxu0 0.0
    %v2478 = vand.u32 %v2084, 4294901760
    %v2479 = vsub.f32 %v2084, %v2478
    %2480 = vmatpush1.msra.mxu0 %v2479
    %2481 = vmatprep.subr.mxu0 0.0
    %v2482 = vand.u32 %v2083, 4294901760
    %v2483 = vsub.f32 %v2083, %v2482
    %2484 = vmatpush1.msra.mxu0 %v2483
    %2485 = vmatprep.subr.mxu0 0.0
    %v2486 = vand.u32 %v2082, 4294901760
    %v2487 = vsub.f32 %v2082, %v2486
    %2488 = vmatpush1.msra.mxu0 %v2487
    %2489 = vmatprep.subr.mxu0 0.0
    %v2490 = vand.u32 %v2081, 4294901760
    %v2491 = vsub.f32 %v2081, %v2490
    %2492 = vmatpush1.msra.mxu0 %v2491
    %2493 = vmatprep.subr.mxu0 0.0
    %v2494 = vand.u32 %v2080, 4294901760
    %v2495 = vsub.f32 %v2080, %v2494
    %2496 = vmatpush1.msra.mxu0 %v2495
    %2497 = vmatprep.subr.mxu0 0.0
    %v2498 = vand.u32 %v2079, 4294901760
    %v2499 = vsub.f32 %v2079, %v2498
    %2500 = vmatpush1.msra.mxu0 %v2499
    %2501 = vmatprep.subr.mxu0 0.0
    %v2502 = vand.u32 %v2078, 4294901760
    %v2503 = vsub.f32 %v2078, %v2502
    %2504 = vmatpush1.msra.mxu0 %v2503
    %2505 = vmatprep.subr.mxu0 0.0
    %v2506 = vand.u32 %v2077, 4294901760
    %v2507 = vsub.f32 %v2077, %v2506
    %2508 = vmatpush1.msra.mxu0 %v2507
    %2509 = vmatprep.subr.mxu0 0.0
    %v2510 = vand.u32 %v2076, 4294901760
    %v2511 = vsub.f32 %v2076, %v2510
    %2512 = vmatpush1.msra.mxu0 %v2511
    %2513 = vmatprep.subr.mxu0 0.0
    %v2514 = vand.u32 %v2075, 4294901760
    %v2515 = vsub.f32 %v2075, %v2514
    %2516 = vmatpush1.msra.mxu0 %v2515
    %2517 = vmatprep.subr.mxu0 0.0
    %v2518 = vand.u32 %v2074, 4294901760
    %v2519 = vsub.f32 %v2074, %v2518
    %2520 = vmatpush1.msra.mxu0 %v2519
    %2521 = vmatprep.subr.mxu0 0.0
    %v2522 = vand.u32 %v2105, 4294901760
    %v2523 = vsub.f32 %v2105, %v2522
    %2524 = vmatpush2.msra.mxu0 %v2523
    %2525 = vmatprep.subr.mxu0 0.0
    %v2526 = vand.u32 %v2104, 4294901760
    %v2527 = vsub.f32 %v2104, %v2526
    %2528 = vmatpush2.msra.mxu0 %v2527
    %2529 = vmatprep.subr.mxu0 0.0
    %v2530 = vand.u32 %v2103, 4294901760
    %v2531 = vsub.f32 %v2103, %v2530
    %2532 = vmatpush2.msra.mxu0 %v2531
    %2533 = vmatprep.subr.mxu0 0.0
    %v2534 = vand.u32 %v2102, 4294901760
    %v2535 = vsub.f32 %v2102, %v2534
    %2536 = vmatpush2.msra.mxu0 %v2535
    %2537 = vmatprep.subr.mxu0 0.0
    %v2538 = vand.u32 %v2101, 4294901760
    %v2539 = vsub.f32 %v2101, %v2538
    %2540 = vmatpush2.msra.mxu0 %v2539
    %2541 = vmatprep.subr.mxu0 0.0
    %v2542 = vand.u32 %v2100, 4294901760
    %v2543 = vsub.f32 %v2100, %v2542
    %2544 = vmatpush2.msra.mxu0 %v2543
    %2545 = vmatprep.subr.mxu0 0.0
    %v2546 = vand.u32 %v2099, 4294901760
    %v2547 = vsub.f32 %v2099, %v2546
    %2548 = vmatpush2.msra.mxu0 %v2547
    %2549 = vmatprep.subr.mxu0 0.0
    %v2550 = vand.u32 %v2098, 4294901760
    %v2551 = vsub.f32 %v2098, %v2550
    %2552 = vmatpush2.msra.mxu0 %v2551
    %2553 = vmatprep.subr.mxu0 0.0
    %v2554 = vand.u32 %v2097, 4294901760
    %v2555 = vsub.f32 %v2097, %v2554
    %2556 = vmatpush2.msra.mxu0 %v2555
    %2557 = vmatprep.subr.mxu0 0.0
    %v2558 = vand.u32 %v2096, 4294901760
    %v2559 = vsub.f32 %v2096, %v2558
    %2560 = vmatpush2.msra.mxu0 %v2559
    %2561 = vmatprep.subr.mxu0 0.0
    %v2562 = vand.u32 %v2095, 4294901760
    %v2563 = vsub.f32 %v2095, %v2562
    %2564 = vmatpush2.msra.mxu0 %v2563
    %2565 = vmatprep.subr.mxu0 0.0
    %v2566 = vand.u32 %v2094, 4294901760
    %v2567 = vsub.f32 %v2094, %v2566
    %2568 = vmatpush2.msra.mxu0 %v2567
    %2569 = vmatprep.subr.mxu0 0.0
    %v2570 = vand.u32 %v2093, 4294901760
    %v2571 = vsub.f32 %v2093, %v2570
    %2572 = vmatpush2.msra.mxu0 %v2571
    %2573 = vmatprep.subr.mxu0 0.0
    %v2574 = vand.u32 %v2092, 4294901760
    %v2575 = vsub.f32 %v2092, %v2574
    %2576 = vmatpush2.msra.mxu0 %v2575
    %2577 = vmatprep.subr.mxu0 0.0
    %v2578 = vand.u32 %v2091, 4294901760
    %v2579 = vsub.f32 %v2091, %v2578
    %2580 = vmatpush2.msra.mxu0 %v2579
    %2581 = vmatprep.subr.mxu0 0.0
    %v2582 = vand.u32 %v2090, 4294901760
    %v2583 = vsub.f32 %v2090, %v2582
    %2584 = vmatpush2.msra.mxu0 %v2583
    %v2585 = vand.u32 %v2073, 4294901760
    %v2586 = vsub.f32 %v2073, %v2585
    %2587 = vmatprep.mubr.f32.mxu0 %v2586
    %v2588 = vand.u32 %v2072, 4294901760
    %v2589 = vsub.f32 %v2072, %v2588
    %2590 = vmatmul.mubr.f32.gmra.mxu0 %v2589
    %v2591 = vpop.f32.mrf.mxu0
    %v2592 = vadd.f32 %v2454, %v2591
    %v2593 = vpop.f32.mrf.mxu0
    %2594 = vdwg.mxu0
    %2595 = vmatprep.subr.mxu0 0.0
    %v2596 = vand.u32 %v2089, 4294901760
    %2597 = vmatpush1.msra.mxu0 %v2596
    %2598 = vmatprep.subr.mxu0 0.0
    %v2599 = vand.u32 %v2088, 4294901760
    %2600 = vmatpush1.msra.mxu0 %v2599
    %2601 = vmatprep.subr.mxu0 0.0
    %v2602 = vand.u32 %v2087, 4294901760
    %2603 = vmatpush1.msra.mxu0 %v2602
    %2604 = vmatprep.subr.mxu0 0.0
    %v2605 = vand.u32 %v2086, 4294901760
    %2606 = vmatpush1.msra.mxu0 %v2605
    %2607 = vmatprep.subr.mxu0 0.0
    %v2608 = vand.u32 %v2085, 4294901760
    %2609 = vmatpush1.msra.mxu0 %v2608
    %2610 = vmatprep.subr.mxu0 0.0
    %v2611 = vand.u32 %v2084, 4294901760
    %2612 = vmatpush1.msra.mxu0 %v2611
    %2613 = vmatprep.subr.mxu0 0.0
    %v2614 = vand.u32 %v2083, 4294901760
    %2615 = vmatpush1.msra.mxu0 %v2614
    %2616 = vmatprep.subr.mxu0 0.0
    %v2617 = vand.u32 %v2082, 4294901760
    %2618 = vmatpush1.msra.mxu0 %v2617
    %2619 = vmatprep.subr.mxu0 0.0
    %v2620 = vand.u32 %v2081, 4294901760
    %2621 = vmatpush1.msra.mxu0 %v2620
    %2622 = vmatprep.subr.mxu0 0.0
    %v2623 = vand.u32 %v2080, 4294901760
    %2624 = vmatpush1.msra.mxu0 %v2623
    %2625 = vmatprep.subr.mxu0 0.0
    %v2626 = vand.u32 %v2079, 4294901760
    %2627 = vmatpush1.msra.mxu0 %v2626
    %2628 = vmatprep.subr.mxu0 0.0
    %v2629 = vand.u32 %v2078, 4294901760
    %2630 = vmatpush1.msra.mxu0 %v2629
    %2631 = vmatprep.subr.mxu0 0.0
    %v2632 = vand.u32 %v2077, 4294901760
    %2633 = vmatpush1.msra.mxu0 %v2632
    %2634 = vmatprep.subr.mxu0 0.0
    %v2635 = vand.u32 %v2076, 4294901760
    %2636 = vmatpush1.msra.mxu0 %v2635
    %2637 = vmatprep.subr.mxu0 0.0
    %v2638 = vand.u32 %v2075, 4294901760
    %2639 = vmatpush1.msra.mxu0 %v2638
    %2640 = vmatprep.subr.mxu0 0.0
    %v2641 = vand.u32 %v2074, 4294901760
    %2642 = vmatpush1.msra.mxu0 %v2641
    %2643 = vmatprep.subr.mxu0 0.0
    %v2644 = vand.u32 %v2105, 4294901760
    %2645 = vmatpush2.msra.mxu0 %v2644
    %2646 = vmatprep.subr.mxu0 0.0
    %v2647 = vand.u32 %v2104, 4294901760
    %2648 = vmatpush2.msra.mxu0 %v2647
    %2649 = vmatprep.subr.mxu0 0.0
    %v2650 = vand.u32 %v2103, 4294901760
    %2651 = vmatpush2.msra.mxu0 %v2650
    %2652 = vmatprep.subr.mxu0 0.0
    %v2653 = vand.u32 %v2102, 4294901760
    %2654 = vmatpush2.msra.mxu0 %v2653
    %2655 = vmatprep.subr.mxu0 0.0
    %v2656 = vand.u32 %v2101, 4294901760
    %2657 = vmatpush2.msra.mxu0 %v2656
    %2658 = vmatprep.subr.mxu0 0.0
    %v2659 = vand.u32 %v2100, 4294901760
    %2660 = vmatpush2.msra.mxu0 %v2659
    %2661 = vmatprep.subr.mxu0 0.0
    %v2662 = vand.u32 %v2099, 4294901760
    %2663 = vmatpush2.msra.mxu0 %v2662
    %2664 = vmatprep.subr.mxu0 0.0
    %v2665 = vand.u32 %v2098, 4294901760
    %2666 = vmatpush2.msra.mxu0 %v2665
    %2667 = vmatprep.subr.mxu0 0.0
    %v2668 = vand.u32 %v2097, 4294901760
    %2669 = vmatpush2.msra.mxu0 %v2668
    %2670 = vmatprep.subr.mxu0 0.0
    %v2671 = vand.u32 %v2096, 4294901760
    %2672 = vmatpush2.msra.mxu0 %v2671
    %2673 = vmatprep.subr.mxu0 0.0
    %v2674 = vand.u32 %v2095, 4294901760
    %2675 = vmatpush2.msra.mxu0 %v2674
    %2676 = vmatprep.subr.mxu0 0.0
    %v2677 = vand.u32 %v2094, 4294901760
    %2678 = vmatpush2.msra.mxu0 %v2677
    %2679 = vmatprep.subr.mxu0 0.0
    %v2680 = vand.u32 %v2093, 4294901760
    %2681 = vmatpush2.msra.mxu0 %v2680
    %2682 = vmatprep.subr.mxu0 0.0
    %v2683 = vand.u32 %v2092, 4294901760
    %2684 = vmatpush2.msra.mxu0 %v2683
    %2685 = vmatprep.subr.mxu0 0.0
    %v2686 = vand.u32 %v2091, 4294901760
    %2687 = vmatpush2.msra.mxu0 %v2686
    %2688 = vmatprep.subr.mxu0 0.0
    %v2689 = vand.u32 %v2090, 4294901760
    %2690 = vmatpush2.msra.mxu0 %v2689
    %v2691 = vand.u32 %v2073, 4294901760
    %v2692 = vsub.f32 %v2073, %v2691
    %v2693 = vand.u32 %v2692, 4294901760
    %2694 = vmatprep.mubr.f32.mxu0 %v2693
    %v2695 = vand.u32 %v2072, 4294901760
    %v2696 = vsub.f32 %v2072, %v2695
    %v2697 = vand.u32 %v2696, 4294901760
    %2698 = vmatmul.mubr.f32.gmra.mxu0 %v2697
    %v2699 = vpop.f32.mrf.mxu0
    %v2700 = vadd.f32 %v2592, %v2699
    %v2701 = vpop.f32.mrf.mxu0
    %2702 = vdwg.mxu0
    %2703 = vmatprep.subr.mxu0 0.0
    %v2704 = vand.u32 %v2089, 4294901760
    %v2705 = vsub.f32 %v2089, %v2704
    %v2706 = vand.u32 %v2705, 4294901760
    %2707 = vmatpush1.msra.mxu0 %v2706
    %2708 = vmatprep.subr.mxu0 0.0
    %v2709 = vand.u32 %v2088, 4294901760
    %v2710 = vsub.f32 %v2088, %v2709
    %v2711 = vand.u32 %v2710, 4294901760
    %2712 = vmatpush1.msra.mxu0 %v2711
    %2713 = vmatprep.subr.mxu0 0.0
    %v2714 = vand.u32 %v2087, 4294901760
    %v2715 = vsub.f32 %v2087, %v2714
    %v2716 = vand.u32 %v2715, 4294901760
    %2717 = vmatpush1.msra.mxu0 %v2716
    %2718 = vmatprep.subr.mxu0 0.0
    %v2719 = vand.u32 %v2086, 4294901760
    %v2720 = vsub.f32 %v2086, %v2719
    %v2721 = vand.u32 %v2720, 4294901760
    %2722 = vmatpush1.msra.mxu0 %v2721
    %2723 = vmatprep.subr.mxu0 0.0
    %v2724 = vand.u32 %v2085, 4294901760
    %v2725 = vsub.f32 %v2085, %v2724
    %v2726 = vand.u32 %v2725, 4294901760
    %2727 = vmatpush1.msra.mxu0 %v2726
    %2728 = vmatprep.subr.mxu0 0.0
    %v2729 = vand.u32 %v2084, 4294901760
    %v2730 = vsub.f32 %v2084, %v2729
    %v2731 = vand.u32 %v2730, 4294901760
    %2732 = vmatpush1.msra.mxu0 %v2731
    %2733 = vmatprep.subr.mxu0 0.0
    %v2734 = vand.u32 %v2083, 4294901760
    %v2735 = vsub.f32 %v2083, %v2734
    %v2736 = vand.u32 %v2735, 4294901760
    %2737 = vmatpush1.msra.mxu0 %v2736
    %2738 = vmatprep.subr.mxu0 0.0
    %v2739 = vand.u32 %v2082, 4294901760
    %v2740 = vsub.f32 %v2082, %v2739
    %v2741 = vand.u32 %v2740, 4294901760
    %2742 = vmatpush1.msra.mxu0 %v2741
    %2743 = vmatprep.subr.mxu0 0.0
    %v2744 = vand.u32 %v2081, 4294901760
    %v2745 = vsub.f32 %v2081, %v2744
    %v2746 = vand.u32 %v2745, 4294901760
    %2747 = vmatpush1.msra.mxu0 %v2746
    %2748 = vmatprep.subr.mxu0 0.0
    %v2749 = vand.u32 %v2080, 4294901760
    %v2750 = vsub.f32 %v2080, %v2749
    %v2751 = vand.u32 %v2750, 4294901760
    %2752 = vmatpush1.msra.mxu0 %v2751
    %2753 = vmatprep.subr.mxu0 0.0
    %v2754 = vand.u32 %v2079, 4294901760
    %v2755 = vsub.f32 %v2079, %v2754
    %v2756 = vand.u32 %v2755, 4294901760
    %2757 = vmatpush1.msra.mxu0 %v2756
    %2758 = vmatprep.subr.mxu0 0.0
    %v2759 = vand.u32 %v2078, 4294901760
    %v2760 = vsub.f32 %v2078, %v2759
    %v2761 = vand.u32 %v2760, 4294901760
    %2762 = vmatpush1.msra.mxu0 %v2761
    %2763 = vmatprep.subr.mxu0 0.0
    %v2764 = vand.u32 %v2077, 4294901760
    %v2765 = vsub.f32 %v2077, %v2764
    %v2766 = vand.u32 %v2765, 4294901760
    %2767 = vmatpush1.msra.mxu0 %v2766
    %2768 = vmatprep.subr.mxu0 0.0
    %v2769 = vand.u32 %v2076, 4294901760
    %v2770 = vsub.f32 %v2076, %v2769
    %v2771 = vand.u32 %v2770, 4294901760
    %2772 = vmatpush1.msra.mxu0 %v2771
    %2773 = vmatprep.subr.mxu0 0.0
    %v2774 = vand.u32 %v2075, 4294901760
    %v2775 = vsub.f32 %v2075, %v2774
    %v2776 = vand.u32 %v2775, 4294901760
    %2777 = vmatpush1.msra.mxu0 %v2776
    %2778 = vmatprep.subr.mxu0 0.0
    %v2779 = vand.u32 %v2074, 4294901760
    %v2780 = vsub.f32 %v2074, %v2779
    %v2781 = vand.u32 %v2780, 4294901760
    %2782 = vmatpush1.msra.mxu0 %v2781
    %2783 = vmatprep.subr.mxu0 0.0
    %v2784 = vand.u32 %v2105, 4294901760
    %v2785 = vsub.f32 %v2105, %v2784
    %v2786 = vand.u32 %v2785, 4294901760
    %2787 = vmatpush2.msra.mxu0 %v2786
    %2788 = vmatprep.subr.mxu0 0.0
    %v2789 = vand.u32 %v2104, 4294901760
    %v2790 = vsub.f32 %v2104, %v2789
    %v2791 = vand.u32 %v2790, 4294901760
    %2792 = vmatpush2.msra.mxu0 %v2791
    %2793 = vmatprep.subr.mxu0 0.0
    %v2794 = vand.u32 %v2103, 4294901760
    %v2795 = vsub.f32 %v2103, %v2794
    %v2796 = vand.u32 %v2795, 4294901760
    %2797 = vmatpush2.msra.mxu0 %v2796
    %2798 = vmatprep.subr.mxu0 0.0
    %v2799 = vand.u32 %v2102, 4294901760
    %v2800 = vsub.f32 %v2102, %v2799
    %v2801 = vand.u32 %v2800, 4294901760
    %2802 = vmatpush2.msra.mxu0 %v2801
    %2803 = vmatprep.subr.mxu0 0.0
    %v2804 = vand.u32 %v2101, 4294901760
    %v2805 = vsub.f32 %v2101, %v2804
    %v2806 = vand.u32 %v2805, 4294901760
    %2807 = vmatpush2.msra.mxu0 %v2806
    %2808 = vmatprep.subr.mxu0 0.0
    %v2809 = vand.u32 %v2100, 4294901760
    %v2810 = vsub.f32 %v2100, %v2809
    %v2811 = vand.u32 %v2810, 4294901760
    %2812 = vmatpush2.msra.mxu0 %v2811
    %2813 = vmatprep.subr.mxu0 0.0
    %v2814 = vand.u32 %v2099, 4294901760
    %v2815 = vsub.f32 %v2099, %v2814
    %v2816 = vand.u32 %v2815, 4294901760
    %2817 = vmatpush2.msra.mxu0 %v2816
    %2818 = vmatprep.subr.mxu0 0.0
    %v2819 = vand.u32 %v2098, 4294901760
    %v2820 = vsub.f32 %v2098, %v2819
    %v2821 = vand.u32 %v2820, 4294901760
    %2822 = vmatpush2.msra.mxu0 %v2821
    %2823 = vmatprep.subr.mxu0 0.0
    %v2824 = vand.u32 %v2097, 4294901760
    %v2825 = vsub.f32 %v2097, %v2824
    %v2826 = vand.u32 %v2825, 4294901760
    %2827 = vmatpush2.msra.mxu0 %v2826
    %2828 = vmatprep.subr.mxu0 0.0
    %v2829 = vand.u32 %v2096, 4294901760
    %v2830 = vsub.f32 %v2096, %v2829
    %v2831 = vand.u32 %v2830, 4294901760
    %2832 = vmatpush2.msra.mxu0 %v2831
    %2833 = vmatprep.subr.mxu0 0.0
    %v2834 = vand.u32 %v2095, 4294901760
    %v2835 = vsub.f32 %v2095, %v2834
    %v2836 = vand.u32 %v2835, 4294901760
    %2837 = vmatpush2.msra.mxu0 %v2836
    %2838 = vmatprep.subr.mxu0 0.0
    %v2839 = vand.u32 %v2094, 4294901760
    %v2840 = vsub.f32 %v2094, %v2839
    %v2841 = vand.u32 %v2840, 4294901760
    %2842 = vmatpush2.msra.mxu0 %v2841
    %2843 = vmatprep.subr.mxu0 0.0
    %v2844 = vand.u32 %v2093, 4294901760
    %v2845 = vsub.f32 %v2093, %v2844
    %v2846 = vand.u32 %v2845, 4294901760
    %2847 = vmatpush2.msra.mxu0 %v2846
    %2848 = vmatprep.subr.mxu0 0.0
    %v2849 = vand.u32 %v2092, 4294901760
    %v2850 = vsub.f32 %v2092, %v2849
    %v2851 = vand.u32 %v2850, 4294901760
    %2852 = vmatpush2.msra.mxu0 %v2851
    %2853 = vmatprep.subr.mxu0 0.0
    %v2854 = vand.u32 %v2091, 4294901760
    %v2855 = vsub.f32 %v2091, %v2854
    %v2856 = vand.u32 %v2855, 4294901760
    %2857 = vmatpush2.msra.mxu0 %v2856
    %2858 = vmatprep.subr.mxu0 0.0
    %v2859 = vand.u32 %v2090, 4294901760
    %v2860 = vsub.f32 %v2090, %v2859
    %v2861 = vand.u32 %v2860, 4294901760
    %2862 = vmatpush2.msra.mxu0 %v2861
    %v2863 = vand.u32 %v2073, 4294901760
    %2864 = vmatprep.mubr.f32.mxu0 %v2863
    %v2865 = vand.u32 %v2072, 4294901760
    %2866 = vmatmul.mubr.f32.gmra.mxu0 %v2865
    %v2867 = vpop.f32.mrf.mxu0
    %v2868 = vadd.f32 %v2700, %v2867
    %v2869 = vpop.f32.mrf.mxu0
    %2870 = vdwg.mxu0
    %2871 = vmatprep.subr.mxu0 0.0
    %v2872 = vand.u32 %v2089, 4294901760
    %2873 = vmatpush1.msra.mxu0 %v2872
    %2874 = vmatprep.subr.mxu0 0.0
    %v2875 = vand.u32 %v2088, 4294901760
    %2876 = vmatpush1.msra.mxu0 %v2875
    %2877 = vmatprep.subr.mxu0 0.0
    %v2878 = vand.u32 %v2087, 4294901760
    %2879 = vmatpush1.msra.mxu0 %v2878
    %2880 = vmatprep.subr.mxu0 0.0
    %v2881 = vand.u32 %v2086, 4294901760
    %2882 = vmatpush1.msra.mxu0 %v2881
    %2883 = vmatprep.subr.mxu0 0.0
    %v2884 = vand.u32 %v2085, 4294901760
    %2885 = vmatpush1.msra.mxu0 %v2884
    %2886 = vmatprep.subr.mxu0 0.0
    %v2887 = vand.u32 %v2084, 4294901760
    %2888 = vmatpush1.msra.mxu0 %v2887
    %2889 = vmatprep.subr.mxu0 0.0
    %v2890 = vand.u32 %v2083, 4294901760
    %2891 = vmatpush1.msra.mxu0 %v2890
    %2892 = vmatprep.subr.mxu0 0.0
    %v2893 = vand.u32 %v2082, 4294901760
    %2894 = vmatpush1.msra.mxu0 %v2893
    %2895 = vmatprep.subr.mxu0 0.0
    %v2896 = vand.u32 %v2081, 4294901760
    %2897 = vmatpush1.msra.mxu0 %v2896
    %2898 = vmatprep.subr.mxu0 0.0
    %v2899 = vand.u32 %v2080, 4294901760
    %2900 = vmatpush1.msra.mxu0 %v2899
    %2901 = vmatprep.subr.mxu0 0.0
    %v2902 = vand.u32 %v2079, 4294901760
    %2903 = vmatpush1.msra.mxu0 %v2902
    %2904 = vmatprep.subr.mxu0 0.0
    %v2905 = vand.u32 %v2078, 4294901760
    %2906 = vmatpush1.msra.mxu0 %v2905
    %2907 = vmatprep.subr.mxu0 0.0
    %v2908 = vand.u32 %v2077, 4294901760
    %2909 = vmatpush1.msra.mxu0 %v2908
    %2910 = vmatprep.subr.mxu0 0.0
    %v2911 = vand.u32 %v2076, 4294901760
    %2912 = vmatpush1.msra.mxu0 %v2911
    %2913 = vmatprep.subr.mxu0 0.0
    %v2914 = vand.u32 %v2075, 4294901760
    %2915 = vmatpush1.msra.mxu0 %v2914
    %2916 = vmatprep.subr.mxu0 0.0
    %v2917 = vand.u32 %v2074, 4294901760
    %2918 = vmatpush1.msra.mxu0 %v2917
    %2919 = vmatprep.subr.mxu0 0.0
    %v2920 = vand.u32 %v2105, 4294901760
    %2921 = vmatpush2.msra.mxu0 %v2920
    %2922 = vmatprep.subr.mxu0 0.0
    %v2923 = vand.u32 %v2104, 4294901760
    %2924 = vmatpush2.msra.mxu0 %v2923
    %2925 = vmatprep.subr.mxu0 0.0
    %v2926 = vand.u32 %v2103, 4294901760
    %2927 = vmatpush2.msra.mxu0 %v2926
    %2928 = vmatprep.subr.mxu0 0.0
    %v2929 = vand.u32 %v2102, 4294901760
    %2930 = vmatpush2.msra.mxu0 %v2929
    %2931 = vmatprep.subr.mxu0 0.0
    %v2932 = vand.u32 %v2101, 4294901760
    %2933 = vmatpush2.msra.mxu0 %v2932
    %2934 = vmatprep.subr.mxu0 0.0
    %v2935 = vand.u32 %v2100, 4294901760
    %2936 = vmatpush2.msra.mxu0 %v2935
    %2937 = vmatprep.subr.mxu0 0.0
    %v2938 = vand.u32 %v2099, 4294901760
    %2939 = vmatpush2.msra.mxu0 %v2938
    %2940 = vmatprep.subr.mxu0 0.0
    %v2941 = vand.u32 %v2098, 4294901760
    %2942 = vmatpush2.msra.mxu0 %v2941
    %2943 = vmatprep.subr.mxu0 0.0
    %v2944 = vand.u32 %v2097, 4294901760
    %2945 = vmatpush2.msra.mxu0 %v2944
    %2946 = vmatprep.subr.mxu0 0.0
    %v2947 = vand.u32 %v2096, 4294901760
    %2948 = vmatpush2.msra.mxu0 %v2947
    %2949 = vmatprep.subr.mxu0 0.0
    %v2950 = vand.u32 %v2095, 4294901760
    %2951 = vmatpush2.msra.mxu0 %v2950
    %2952 = vmatprep.subr.mxu0 0.0
    %v2953 = vand.u32 %v2094, 4294901760
    %2954 = vmatpush2.msra.mxu0 %v2953
    %2955 = vmatprep.subr.mxu0 0.0
    %v2956 = vand.u32 %v2093, 4294901760
    %2957 = vmatpush2.msra.mxu0 %v2956
    %2958 = vmatprep.subr.mxu0 0.0
    %v2959 = vand.u32 %v2092, 4294901760
    %2960 = vmatpush2.msra.mxu0 %v2959
    %2961 = vmatprep.subr.mxu0 0.0
    %v2962 = vand.u32 %v2091, 4294901760
    %2963 = vmatpush2.msra.mxu0 %v2962
    %2964 = vmatprep.subr.mxu0 0.0
    %v2965 = vand.u32 %v2090, 4294901760
    %2966 = vmatpush2.msra.mxu0 %v2965
    %v2967 = vand.u32 %v2073, 4294901760
    %2968 = vmatprep.mubr.f32.mxu0 %v2967
    %v2969 = vand.u32 %v2072, 4294901760
    %2970 = vmatmul.mubr.f32.gmra.mxu0 %v2969
    %v2971 = vpop.f32.mrf.mxu0
    %v2972 = vadd.f32 %v2868, %v2971
    %v2973 = vpop.f32.mrf.mxu0
    %2974 = vdwg.mxu0
    %2975 = vst.msk [vmem:[#allocation4] sm:$0x3] %vm1507, %v2972
    // Predicated region
    $region38: #{tpu_custom_call.1} parent=1 // pred_check
      _
    $region39: #{tpu_custom_call.1} parent=1 // pred_check_branch
      %2977 = sbr.rel (0) target = $region41
    $region40: #{tpu_custom_call.1} parent=1 // pred_region
      %s2979 = ssub.s32 32, 32
      %2980 = vsyncadd [#allocation3], %s2979
      %s2982 = sshll.u32 [#allocation2], 4
      %s2983 = int_to_ptr.vmem [resolvable:$true] %s2982
      %2985 = dma.vmem_to_hbm [thread:$0]  %s2983, 32, %s9, [#allocation3]
    $region41: #{tpu_custom_call.1} parent=1 // pred_fallthru
      _
    // Predicated region
    $region42: #{tpu_custom_call.1} parent=1 // pred_check
      _
    $region43: #{tpu_custom_call.1} parent=1 // pred_check_branch
      %2987 = sbr.rel (0) target = $region45
    $region44: #{tpu_custom_call.1} parent=1 // pred_region
      %s2989 = ssub.s32 32, 32
      %2990 = vsyncadd [#allocation5], %s2989
      %s2992 = sshll.u32 [#allocation4], 4
      %s2993 = int_to_ptr.vmem [resolvable:$true] %s2992
      %2995 = dma.vmem_to_hbm [thread:$0]  %s2993, 32, %s10, [#allocation5]
    $region45: #{tpu_custom_call.1} parent=1 // pred_fallthru
      _
    // Predicated region
    $region46: #{tpu_custom_call.1} parent=1 // pred_check
      _
    $region47: #{tpu_custom_call.1} parent=1 // pred_check_branch
      %2997 = sbr.rel (0) target = $region49
    $region48: #{tpu_custom_call.1} parent=1 // pred_region
      %2998 = dma.done [#allocation3], 32
    $region49: #{tpu_custom_call.1} parent=1 // pred_fallthru
      _
    // Predicated region
    $region50: #{tpu_custom_call.1} parent=1 // pred_check
      _
    $region51: #{tpu_custom_call.1} parent=1 // pred_check_branch
      %3000 = sbr.rel (0) target = $region53
    $region52: #{tpu_custom_call.1} parent=1 // pred_region
      %3001 = dma.done [#allocation5], 32
    $region53: #{tpu_custom_call.1} parent=1 // pred_fallthru
      _
    %3002 = vsyncpa [#allocation3], 1
    %3003 = vsyncpa [#allocation5], 1

</llo_original>
